<compile_context>
chip_gen: v5e
topology: v5e:2x2
jax: 0.10.0
libtpu: 0.0.40
codegen_flags: <defaults>
</compile_context>

<pallas_src>
import functools

import jax
import jax.numpy as jnp
from jax.experimental import pallas as pl
from jax.experimental.pallas import tpu as pltpu

EPS = 1e-5  # nn.BatchNorm2d default eps


# ----------------------------------------------------------------------------
# Kernel
# ----------------------------------------------------------------------------
def _residual_layer_kernel(x_ref, w1_ref, g1_ref, be1_ref,
                           w2_ref, g2_ref, be2_ref, out_ref,
                           *, n_blocks, c, h, inv_count):
    """n_blocks fused residual blocks on a packed (N*H, W*C) activation slab.

    x_ref          : (N*H, W*C)          packed activations, lane = w*C + channel
    w1_ref, w2_ref : (nb, 3, W*C, W*C)   per-block, per-kh-tap banded conv weights
                                         (kw taps + W zero padding folded in)
    g*/be*         : (nb, 1, W*C)        BN gamma / beta, tiled across w so they
                                         are lane-aligned with the packing
    """
    nh, wc = x_ref.shape
    mxu_dtype = w1_ref.dtype  # bf16 (fast path) or f32 (checking path)

    # Hoisted constants — JAX does not CSE broadcasts, so build them exactly once.
    row = jax.lax.broadcasted_iota(jnp.int32, (nh, wc), 0)
    top = (row % h) == 0           # first row of each image: h-1 neighbour is pad
    bot = (row % h) == (h - 1)     # last row of each image : h+1 neighbour is pad
    li = jax.lax.broadcasted_iota(jnp.int32, (wc, wc), 0)
    lj = jax.lax.broadcasted_iota(jnp.int32, (wc, wc), 1)
    fold = ((li % c) == (lj % c)).astype(jnp.float32)  # 0/1 channel-fold + lane-bcast
    zrow = jnp.zeros((1, wc), jnp.float32)

    def conv_bn(inp, w_taps, gamma, beta):
        # --- +-1 row shift in H: sublane data movement + boundary masks -------
        up = jnp.where(top, 0.0, jnp.concatenate([zrow, inp[:-1, :]], axis=0))
        dn = jnp.where(bot, 0.0, jnp.concatenate([inp[1:, :], zrow], axis=0))
        # --- 3x3 conv: three K=128 lane-dense MXU matmuls (bf16 in, f32 acc) --
        acc = jnp.dot(up.astype(mxu_dtype), w_taps[0],
                      preferred_element_type=jnp.float32)
        acc = acc + jnp.dot(inp.astype(mxu_dtype), w_taps[1],
                            preferred_element_type=jnp.float32)
        acc = acc + jnp.dot(dn.astype(mxu_dtype), w_taps[2],
                            preferred_element_type=jnp.float32)
        # (conv bias intentionally omitted: cancelled exactly by BN mean sub)
        # --- training-mode BatchNorm2d, single-pass stats ----------------------
        st = jnp.concatenate([jnp.sum(acc, axis=0, keepdims=True),
                              jnp.sum(acc * acc, axis=0, keepdims=True)], axis=0)
        st = jnp.dot(st, fold, preferred_element_type=jnp.float32)   # per-channel
        mean = st[0:1, :] * inv_count
        var = jnp.maximum(st[1:2, :] * inv_count - mean * mean, 0.0)  # biased var
        scale = gamma * jax.lax.rsqrt(var + EPS)
        shift = beta - mean * scale
        return acc * scale + shift                                   # folded BN FMA

    x = x_ref[...].astype(jnp.float32)
    for b in range(n_blocks):        # blocks fused: slab stays resident in VMEM
        w1 = (w1_ref[b, 0], w1_ref[b, 1], w1_ref[b, 2])
        w2 = (w2_ref[b, 0], w2_ref[b, 1], w2_ref[b, 2])
        y = jnp.maximum(conv_bn(x, w1, g1_ref[b], be1_ref[b]), 0.0)
        y = conv_bn(y, w2, g2_ref[b], be2_ref[b])
        x = jnp.maximum(y + x, 0.0)
    out_ref[...] = x.astype(out_ref.dtype)   # lane-dense full-width store


# ----------------------------------------------------------------------------
# Host-side (one-time) weight / layout packing
# ----------------------------------------------------------------------------
def _make_tap_weights(w_oihw, w_spatial):
    """(Cout, Cin, 3, 3) -> (3, W*Cin, W*Cout): one banded matrix per kh tap.

    tap[kh][w_in*Cin + ci, w_out*Cout + co] = w[co, ci, kh, w_in - w_out + 1]
    when |w_in - w_out| <= 1, else 0  (W-direction zero padding built in).
    """
    cout, cin, kh_sz, kw_sz = w_oihw.shape
    w_hwio = jnp.transpose(w_oihw, (2, 3, 1, 0))               # (3,3,Cin,Cout)
    win = jnp.arange(w_spatial)[:, None]
    wout = jnp.arange(w_spatial)[None, :]
    kw = win - wout + 1                                        # (W, W)
    valid = (kw >= 0) & (kw < kw_sz)
    kw_c = jnp.clip(kw, 0, kw_sz - 1)
    blk = w_hwio[:, kw_c, :, :]                                # (3,Win,Wout,Cin,Cout)
    blk = blk * valid[None, :, :, None, None].astype(w_hwio.dtype)
    blk = jnp.transpose(blk, (0, 1, 3, 2, 4))                  # (3,Win,Cin,Wout,Cout)
    return blk.reshape(kh_sz, w_spatial * cin, w_spatial * cout)


def _lane_tile(v, w_spatial):
    """(C,) per-channel vector -> (1, W*C) lane vector (lane w*C + c -> v[c])."""
    return jnp.tile(v, (w_spatial,)).reshape(1, -1)


def pack_residual_layer_params(blocks, *, w, c, dtype=jnp.bfloat16):
    """Pack PyTorch-style per-block params into lane-dense kernel operands.

    Conv biases (b1/b2) are accepted but IGNORED: a per-channel bias followed by
    training-mode BatchNorm cancels exactly in the mean subtraction.
    `dtype` is the MXU-operand dtype for the conv weights (bf16 for speed).
    """
    assert (w * c) % 128 == 0, "lane-dense packing wants W*C to be a multiple of 128"
    f32 = jnp.float32
    return {
        "w1": jnp.stack([_make_tap_weights(p["w1"], w) for p in blocks]).astype(dtype),
        "g1": jnp.stack([_lane_tile(p["g1"], w) for p in blocks]).astype(f32),
        "be1": jnp.stack([_lane_tile(p["be1"], w) for p in blocks]).astype(f32),
        "w2": jnp.stack([_make_tap_weights(p["w2"], w) for p in blocks]).astype(dtype),
        "g2": jnp.stack([_lane_tile(p["g2"], w) for p in blocks]).astype(f32),
        "be2": jnp.stack([_lane_tile(p["be2"], w) for p in blocks]).astype(f32),
    }


# ----------------------------------------------------------------------------
# pallas_call wrappers
# ----------------------------------------------------------------------------
def residual_layer_packed(x_packed, pp, *, n, h, w, c):
    """Fused residual-block layer on packed (N*H, W*C) activations.

    Everything (x, the per-tap 32 KiB bf16 weights, BN vectors, output) is far
    below 1 MiB, so whole-array VMEM residency with no grid is used.  Realistic
    ResNet shapes would tile over N*H rows (parallel grid axis, two-pass BN)
    and budget against v7x's 64 MiB VMEM.
    """
    nh, wc = x_packed.shape
    nb = pp["w1"].shape[0]
    kernel = functools.partial(_residual_layer_kernel, n_blocks=nb, c=c, h=h,
                               inv_count=1.0 / float(n * h * w))
    vmem = pl.BlockSpec(memory_space=pltpu.MemorySpace.VMEM)
    inputs = [x_packed, pp["w1"], pp["g1"], pp["be1"],
              pp["w2"], pp["g2"], pp["be2"]]
    return pl.pallas_call(
        kernel,
        out_shape=jax.ShapeDtypeStruct((nh, wc), x_packed.dtype),
        in_specs=[vmem] * len(inputs),
        out_specs=vmem,
    )(*inputs)


def residual_layer_nchw(x_nchw, pp):
    """NCHW convenience wrapper; in a multi-layer network the NCHW<->packed
    transposes live once at the model boundary, not per layer."""
    n, c, h, w = x_nchw.shape
    x_packed = jnp.transpose(x_nchw, (0, 2, 3, 1)).reshape(n * h, w * c)
    out_packed = residual_layer_packed(x_packed, pp, n=n, h=h, w=w, c=c)
    return jnp.transpose(out_packed.reshape(n, h, w, c), (0, 3, 1, 2))


# ----------------------------------------------------------------------------
# Pure-JAX reference (module semantics, f32, with conv bias) for correctness
# ----------------------------------------------------------------------------
def _reference(x_nchw, blocks):
    x = jnp.transpose(x_nchw, (0, 2, 3, 1))

    def conv(inp, w_oihw, b):
        w_hwio = jnp.transpose(w_oihw, (2, 3, 1, 0))
        y = jax.lax.conv_general_dilated(
            inp, w_hwio, (1, 1), "SAME",
            dimension_numbers=("NHWC", "HWIO", "NHWC"),
            precision=jax.lax.Precision.HIGHEST)
        return y + b

    def bn(y, g, be):
        m = jnp.mean(y, axis=(0, 1, 2), keepdims=True)
        v = jnp.mean((y - m) ** 2, axis=(0, 1, 2), keepdims=True)
        return (y - m) * jax.lax.rsqrt(v + EPS) * g + be

    for p in blocks:
        y = jax.nn.relu(bn(conv(x, p["w1"], p["b1"]), p["g1"], p["be1"]))
        y = bn(conv(y, p["w2"], p["b2"]), p["g2"], p["be2"])
        x = jax.nn.relu(y + x)
    return jnp.transpose(x, (0, 3, 1, 2))


if __name__ == "__main__":
    # Small shapes consistent with the block used by _make_layer (stride=1, no
    # downsample): NCHW x = (2, 8, 16, 16), two blocks (like layers[0] = 2).
    # W*C = 16*8 = 128 -> exactly lane-dense packing.
    N, C, H, W = 2, 8, 16, 16
    NUM_BLOCKS = 2

    key = jax.random.PRNGKey(0)
    keys = jax.random.split(key, 1 + 4 * NUM_BLOCKS)
    x = jax.random.normal(keys[0], (N, C, H, W), jnp.float32)

    scale = 1.0 / jnp.sqrt(9.0 * C)  # kaiming-ish, fan_in = 3*3*C
    blocks = []
    for i in range(NUM_BLOCKS):
        k = keys[1 + 4 * i: 1 + 4 * (i + 1)]
        blocks.append({
            "w1": jax.random.normal(k[0], (C, C, 3, 3), jnp.float32) * scale,
            "b1": jax.random.normal(k[1], (C,), jnp.float32) * 0.1,
            "g1": jnp.ones((C,), jnp.float32),   # BatchNorm2d default init
            "be1": jnp.zeros((C,), jnp.float32),
            "w2": jax.random.normal(k[2], (C, C, 3, 3), jnp.float32) * scale,
            "b2": jax.random.normal(k[3], (C,), jnp.float32) * 0.1,
            "g2": jnp.ones((C,), jnp.float32),
            "be2": jnp.zeros((C,), jnp.float32),
        })

    ref = jax.block_until_ready(_reference(x, blocks))

    # f32 MXU-operand path: tight check of the fused conv/BN/residual math.
    packed_f32 = pack_residual_layer_params(blocks, w=W, c=C, dtype=jnp.float32)
    out_f32 = jax.block_until_ready(residual_layer_nchw(x, packed_f32))
    assert out_f32.shape == x.shape and out_f32.dtype == x.dtype
    err_f32 = float(jnp.max(jnp.abs(out_f32 - ref)))
    assert err_f32 < 5e-3, f"f32-path max abs error too large: {err_f32}"

    # bf16 MXU-operand path (default fast path): looser tolerance for bf16 inputs.
    packed_bf16 = pack_residual_layer_params(blocks, w=W, c=C, dtype=jnp.bfloat16)
    out_bf16 = jax.block_until_ready(residual_layer_nchw(x, packed_bf16))
    assert out_bf16.shape == x.shape and out_bf16.dtype == x.dtype
    err_bf16 = float(jnp.max(jnp.abs(out_bf16 - ref)))
    mean_err_bf16 = float(jnp.mean(jnp.abs(out_bf16 - ref)))
    assert err_bf16 < 1e-1 and mean_err_bf16 < 1e-2, (
        f"bf16-path error too large: max={err_bf16}, mean={mean_err_bf16}")

    print("KERNEL_OK")
</pallas_src>

<mosaic_0001>
module attributes {stable_mosaic.version = 11 : i64} {
  func.func @_residual_layer_kernel(%arg0: memref<32x128xf32, #tpu.memory_space<vmem>>, %arg1: memref<2x3x128x128xf32, #tpu.memory_space<vmem>>, %arg2: memref<2x1x128xf32, #tpu.memory_space<vmem>>, %arg3: memref<2x1x128xf32, #tpu.memory_space<vmem>>, %arg4: memref<2x3x128x128xf32, #tpu.memory_space<vmem>>, %arg5: memref<2x1x128xf32, #tpu.memory_space<vmem>>, %arg6: memref<2x1x128xf32, #tpu.memory_space<vmem>>, %arg7: memref<32x128xf32, #tpu.memory_space<vmem>>) attributes {dimension_semantics = [], scalar_prefetch = 0 : i64, scratch_operands = 0 : i64, tpu.core_type = #tpu.core_type<tc>} {
    %0 = tpu.iota {dimensions = array<i32: 0>} : vector<32x128xi32>
    %c16_i32 = arith.constant 16 : i32
    %c0_i32 = arith.constant 0 : i32
    %1 = arith.cmpi eq, %c16_i32, %c0_i32 : i32
    %c1_i32 = arith.constant 1 : i32
    %2 = arith.select %1, %c1_i32, %c16_i32 : i32
    %3 = vector.broadcast %2 : i32 to vector<32x128xi32>
    %4 = arith.remsi %0, %3 : vector<32x128xi32>
    %c0_i32_0 = arith.constant 0 : i32
    %5 = vector.broadcast %c0_i32_0 : i32 to vector<32x128xi32>
    %6 = arith.cmpi ne, %4, %5 : vector<32x128xi32>
    %c0_i32_1 = arith.constant 0 : i32
    %7 = vector.broadcast %c0_i32_1 : i32 to vector<32x128xi32>
    %8 = arith.cmpi slt, %4, %7 : vector<32x128xi32>
    %c0_i32_2 = arith.constant 0 : i32
    %9 = arith.cmpi slt, %2, %c0_i32_2 : i32
    %10 = vector.broadcast %9 : i1 to vector<32x128xi1>
    %11 = vector.broadcast %10 : vector<32x128xi1> to vector<32x128xi1>
    %12 = arith.xori %8, %11 : vector<32x128xi1>
    %13 = arith.andi %12, %6 : vector<32x128xi1>
    %14 = vector.broadcast %2 : i32 to vector<32x128xi32>
    %15 = arith.addi %4, %14 : vector<32x128xi32>
    %16 = arith.select %13, %15, %4 : vector<32x128xi1>, vector<32x128xi32>
    %c0_i32_3 = arith.constant 0 : i32
    %17 = vector.broadcast %c0_i32_3 : i32 to vector<32x128xi32>
    %18 = arith.cmpi eq, %16, %17 : vector<32x128xi32>
    %c16_i32_4 = arith.constant 16 : i32
    %c0_i32_5 = arith.constant 0 : i32
    %19 = arith.cmpi eq, %c16_i32_4, %c0_i32_5 : i32
    %c1_i32_6 = arith.constant 1 : i32
    %20 = arith.select %19, %c1_i32_6, %c16_i32_4 : i32
    %21 = vector.broadcast %20 : i32 to vector<32x128xi32>
    %22 = arith.remsi %0, %21 : vector<32x128xi32>
    %c0_i32_7 = arith.constant 0 : i32
    %23 = vector.broadcast %c0_i32_7 : i32 to vector<32x128xi32>
    %24 = arith.cmpi ne, %22, %23 : vector<32x128xi32>
    %c0_i32_8 = arith.constant 0 : i32
    %25 = vector.broadcast %c0_i32_8 : i32 to vector<32x128xi32>
    %26 = arith.cmpi slt, %22, %25 : vector<32x128xi32>
    %c0_i32_9 = arith.constant 0 : i32
    %27 = arith.cmpi slt, %20, %c0_i32_9 : i32
    %28 = vector.broadcast %27 : i1 to vector<32x128xi1>
    %29 = vector.broadcast %28 : vector<32x128xi1> to vector<32x128xi1>
    %30 = arith.xori %26, %29 : vector<32x128xi1>
    %31 = arith.andi %30, %24 : vector<32x128xi1>
    %32 = vector.broadcast %20 : i32 to vector<32x128xi32>
    %33 = arith.addi %22, %32 : vector<32x128xi32>
    %34 = arith.select %31, %33, %22 : vector<32x128xi1>, vector<32x128xi32>
    %c15_i32 = arith.constant 15 : i32
    %35 = vector.broadcast %c15_i32 : i32 to vector<32x128xi32>
    %36 = arith.cmpi eq, %34, %35 : vector<32x128xi32>
    %37 = tpu.iota {dimensions = array<i32: 0>} : vector<128x128xi32>
    %38 = tpu.iota {dimensions = array<i32: 1>} : vector<128x128xi32>
    %c8_i32 = arith.constant 8 : i32
    %c0_i32_10 = arith.constant 0 : i32
    %39 = arith.cmpi eq, %c8_i32, %c0_i32_10 : i32
    %c1_i32_11 = arith.constant 1 : i32
    %40 = arith.select %39, %c1_i32_11, %c8_i32 : i32
    %41 = vector.broadcast %40 : i32 to vector<128x128xi32>
    %42 = arith.remsi %37, %41 : vector<128x128xi32>
    %c0_i32_12 = arith.constant 0 : i32
    %43 = vector.broadcast %c0_i32_12 : i32 to vector<128x128xi32>
    %44 = arith.cmpi ne, %42, %43 : vector<128x128xi32>
    %c0_i32_13 = arith.constant 0 : i32
    %45 = vector.broadcast %c0_i32_13 : i32 to vector<128x128xi32>
    %46 = arith.cmpi slt, %42, %45 : vector<128x128xi32>
    %c0_i32_14 = arith.constant 0 : i32
    %47 = arith.cmpi slt, %40, %c0_i32_14 : i32
    %48 = vector.broadcast %47 : i1 to vector<128x128xi1>
    %49 = vector.broadcast %48 : vector<128x128xi1> to vector<128x128xi1>
    %50 = arith.xori %46, %49 : vector<128x128xi1>
    %51 = arith.andi %50, %44 : vector<128x128xi1>
    %52 = vector.broadcast %40 : i32 to vector<128x128xi32>
    %53 = arith.addi %42, %52 : vector<128x128xi32>
    %54 = arith.select %51, %53, %42 : vector<128x128xi1>, vector<128x128xi32>
    %c8_i32_15 = arith.constant 8 : i32
    %c0_i32_16 = arith.constant 0 : i32
    %55 = arith.cmpi eq, %c8_i32_15, %c0_i32_16 : i32
    %c1_i32_17 = arith.constant 1 : i32
    %56 = arith.select %55, %c1_i32_17, %c8_i32_15 : i32
    %57 = vector.broadcast %56 : i32 to vector<128x128xi32>
    %58 = arith.remsi %38, %57 : vector<128x128xi32>
    %c0_i32_18 = arith.constant 0 : i32
    %59 = vector.broadcast %c0_i32_18 : i32 to vector<128x128xi32>
    %60 = arith.cmpi ne, %58, %59 : vector<128x128xi32>
    %c0_i32_19 = arith.constant 0 : i32
    %61 = vector.broadcast %c0_i32_19 : i32 to vector<128x128xi32>
    %62 = arith.cmpi slt, %58, %61 : vector<128x128xi32>
    %c0_i32_20 = arith.constant 0 : i32
    %63 = arith.cmpi slt, %56, %c0_i32_20 : i32
    %64 = vector.broadcast %63 : i1 to vector<128x128xi1>
    %65 = vector.broadcast %64 : vector<128x128xi1> to vector<128x128xi1>
    %66 = arith.xori %62, %65 : vector<128x128xi1>
    %67 = arith.andi %66, %60 : vector<128x128xi1>
    %68 = vector.broadcast %56 : i32 to vector<128x128xi32>
    %69 = arith.addi %58, %68 : vector<128x128xi32>
    %70 = arith.select %67, %69, %58 : vector<128x128xi1>, vector<128x128xi32>
    %71 = arith.cmpi eq, %54, %70 : vector<128x128xi32>
    %72 = arith.extui %71 : vector<128x128xi1> to vector<128x128xi32>
    %73 = arith.sitofp %72 : vector<128x128xi32> to vector<128x128xf32>
    %cst = arith.constant 0.000000e+00 : f32
    %74 = vector.broadcast %cst : f32 to vector<1x128xf32>
    %c0 = arith.constant 0 : index
    %c0_21 = arith.constant 0 : index
    %75 = vector.load %arg0[%c0, %c0_21] : memref<32x128xf32, #tpu.memory_space<vmem>>, vector<32x128xf32>
    %c0_22 = arith.constant 0 : index
    %c0_23 = arith.constant 0 : index
    %c0_24 = arith.constant 0 : index
    %c0_25 = arith.constant 0 : index
    %76 = vector.load %arg1[%c0_22, %c0_23, %c0_24, %c0_25] : memref<2x3x128x128xf32, #tpu.memory_space<vmem>>, vector<1x1x128x128xf32>
    %77 = vector.shape_cast %76 : vector<1x1x128x128xf32> to vector<128x128xf32>
    %c0_26 = arith.constant 0 : index
    %c1 = arith.constant 1 : index
    %c0_27 = arith.constant 0 : index
    %c0_28 = arith.constant 0 : index
    %78 = vector.load %arg1[%c0_26, %c1, %c0_27, %c0_28] : memref<2x3x128x128xf32, #tpu.memory_space<vmem>>, vector<1x1x128x128xf32>
    %79 = vector.shape_cast %78 : vector<1x1x128x128xf32> to vector<128x128xf32>
    %c0_29 = arith.constant 0 : index
    %c2 = arith.constant 2 : index
    %c0_30 = arith.constant 0 : index
    %c0_31 = arith.constant 0 : index
    %80 = vector.load %arg1[%c0_29, %c2, %c0_30, %c0_31] : memref<2x3x128x128xf32, #tpu.memory_space<vmem>>, vector<1x1x128x128xf32>
    %81 = vector.shape_cast %80 : vector<1x1x128x128xf32> to vector<128x128xf32>
    %c0_32 = arith.constant 0 : index
    %c0_33 = arith.constant 0 : index
    %c0_34 = arith.constant 0 : index
    %c0_35 = arith.constant 0 : index
    %82 = vector.load %arg4[%c0_32, %c0_33, %c0_34, %c0_35] : memref<2x3x128x128xf32, #tpu.memory_space<vmem>>, vector<1x1x128x128xf32>
    %83 = vector.shape_cast %82 : vector<1x1x128x128xf32> to vector<128x128xf32>
    %c0_36 = arith.constant 0 : index
    %c1_37 = arith.constant 1 : index
    %c0_38 = arith.constant 0 : index
    %c0_39 = arith.constant 0 : index
    %84 = vector.load %arg4[%c0_36, %c1_37, %c0_38, %c0_39] : memref<2x3x128x128xf32, #tpu.memory_space<vmem>>, vector<1x1x128x128xf32>
    %85 = vector.shape_cast %84 : vector<1x1x128x128xf32> to vector<128x128xf32>
    %c0_40 = arith.constant 0 : index
    %c2_41 = arith.constant 2 : index
    %c0_42 = arith.constant 0 : index
    %c0_43 = arith.constant 0 : index
    %86 = vector.load %arg4[%c0_40, %c2_41, %c0_42, %c0_43] : memref<2x3x128x128xf32, #tpu.memory_space<vmem>>, vector<1x1x128x128xf32>
    %87 = vector.shape_cast %86 : vector<1x1x128x128xf32> to vector<128x128xf32>
    %c0_44 = arith.constant 0 : index
    %c0_45 = arith.constant 0 : index
    %c0_46 = arith.constant 0 : index
    %88 = vector.load %arg2[%c0_44, %c0_45, %c0_46] : memref<2x1x128xf32, #tpu.memory_space<vmem>>, vector<1x1x128xf32>
    %89 = vector.shape_cast %88 : vector<1x1x128xf32> to vector<1x128xf32>
    %c0_47 = arith.constant 0 : index
    %c0_48 = arith.constant 0 : index
    %c0_49 = arith.constant 0 : index
    %90 = vector.load %arg3[%c0_47, %c0_48, %c0_49] : memref<2x1x128xf32, #tpu.memory_space<vmem>>, vector<1x1x128xf32>
    %91 = vector.shape_cast %90 : vector<1x1x128xf32> to vector<1x128xf32>
    %92 = vector.extract_strided_slice %75 {offsets = [0, 0], sizes = [31, 128], strides = [1, 1]} : vector<32x128xf32> to vector<31x128xf32>
    %93 = tpu.concatenate %74, %92 in 0 : vector<1x128xf32>, vector<31x128xf32> -> vector<32x128xf32>
    %cst_50 = arith.constant 0.000000e+00 : f32
    %94 = vector.broadcast %cst_50 : f32 to vector<32x128xf32>
    %95 = arith.select %18, %94, %93 : vector<32x128xi1>, vector<32x128xf32>
    %96 = vector.extract_strided_slice %75 {offsets = [1, 0], sizes = [31, 128], strides = [1, 1]} : vector<32x128xf32> to vector<31x128xf32>
    %97 = tpu.concatenate %96, %74 in 0 : vector<31x128xf32>, vector<1x128xf32> -> vector<32x128xf32>
    %cst_51 = arith.constant 0.000000e+00 : f32
    %98 = vector.broadcast %cst_51 : f32 to vector<32x128xf32>
    %99 = arith.select %36, %98, %97 : vector<32x128xi1>, vector<32x128xf32>
    %cst_52 = arith.constant dense<0.000000e+00> : vector<32x128xf32>
    %100 = tpu.matmul %95, %77, %cst_52 {dimension_numbers = #tpu.dot_dimension_numbers<[1], [0], [0], [1], [0, 0, 1, 1], [], []>} : vector<32x128xf32>, vector<128x128xf32>, vector<32x128xf32> -> vector<32x128xf32>
    %cst_53 = arith.constant dense<0.000000e+00> : vector<32x128xf32>
    %101 = tpu.matmul %75, %79, %cst_53 {dimension_numbers = #tpu.dot_dimension_numbers<[1], [0], [0], [1], [0, 0, 1, 1], [], []>} : vector<32x128xf32>, vector<128x128xf32>, vector<32x128xf32> -> vector<32x128xf32>
    %102 = arith.addf %100, %101 : vector<32x128xf32>
    %cst_54 = arith.constant dense<0.000000e+00> : vector<32x128xf32>
    %103 = tpu.matmul %99, %81, %cst_54 {dimension_numbers = #tpu.dot_dimension_numbers<[1], [0], [0], [1], [0, 0, 1, 1], [], []>} : vector<32x128xf32>, vector<128x128xf32>, vector<32x128xf32> -> vector<32x128xf32>
    %104 = arith.addf %102, %103 : vector<32x128xf32>
    %cst_55 = arith.constant dense<0.000000e+00> : vector<128xf32>
    %105 = vector.multi_reduction <add>, %104, %cst_55 [0] : vector<32x128xf32> to vector<128xf32>
    %106 = vector.shape_cast %105 : vector<128xf32> to vector<1x128xf32>
    %107 = arith.mulf %104, %104 : vector<32x128xf32>
    %cst_56 = arith.constant dense<0.000000e+00> : vector<128xf32>
    %108 = vector.multi_reduction <add>, %107, %cst_56 [0] : vector<32x128xf32> to vector<128xf32>
    %109 = vector.shape_cast %108 : vector<128xf32> to vector<1x128xf32>
    %110 = tpu.concatenate %106, %109 in 0 : vector<1x128xf32>, vector<1x128xf32> -> vector<2x128xf32>
    %cst_57 = arith.constant dense<0.000000e+00> : vector<2x128xf32>
    %111 = tpu.matmul %110, %73, %cst_57 {dimension_numbers = #tpu.dot_dimension_numbers<[1], [0], [0], [1], [0, 0, 1, 1], [], []>} : vector<2x128xf32>, vector<128x128xf32>, vector<2x128xf32> -> vector<2x128xf32>
    %112 = vector.extract_strided_slice %111 {offsets = [0, 0], sizes = [1, 128], strides = [1, 1]} : vector<2x128xf32> to vector<1x128xf32>
    %cst_58 = arith.constant 0.001953125 : f32
    %113 = vector.broadcast %cst_58 : f32 to vector<1x128xf32>
    %114 = arith.mulf %112, %113 : vector<1x128xf32>
    %115 = vector.extract_strided_slice %111 {offsets = [1, 0], sizes = [1, 128], strides = [1, 1]} : vector<2x128xf32> to vector<1x128xf32>
    %cst_59 = arith.constant 0.001953125 : f32
    %116 = vector.broadcast %cst_59 : f32 to vector<1x128xf32>
    %117 = arith.mulf %115, %116 : vector<1x128xf32>
    %118 = arith.mulf %114, %114 : vector<1x128xf32>
    %119 = arith.subf %117, %118 : vector<1x128xf32>
    %cst_60 = arith.constant 0.000000e+00 : f32
    %120 = vector.broadcast %cst_60 : f32 to vector<1x128xf32>
    %121 = arith.maximumf %119, %120 : vector<1x128xf32>
    %cst_61 = arith.constant 9.99999974E-6 : f32
    %122 = vector.broadcast %cst_61 : f32 to vector<1x128xf32>
    %123 = arith.addf %121, %122 : vector<1x128xf32>
    %124 = math.rsqrt %123 : vector<1x128xf32>
    %125 = arith.mulf %89, %124 : vector<1x128xf32>
    %126 = arith.mulf %114, %125 : vector<1x128xf32>
    %127 = arith.subf %91, %126 : vector<1x128xf32>
    %128 = vector.broadcast %125 : vector<1x128xf32> to vector<32x128xf32>
    %129 = arith.mulf %104, %128 : vector<32x128xf32>
    %130 = vector.broadcast %127 : vector<1x128xf32> to vector<32x128xf32>
    %131 = arith.addf %129, %130 : vector<32x128xf32>
    %cst_62 = arith.constant 0.000000e+00 : f32
    %132 = vector.broadcast %cst_62 : f32 to vector<32x128xf32>
    %133 = arith.maximumf %131, %132 : vector<32x128xf32>
    %c0_63 = arith.constant 0 : index
    %c0_64 = arith.constant 0 : index
    %c0_65 = arith.constant 0 : index
    %134 = vector.load %arg5[%c0_63, %c0_64, %c0_65] : memref<2x1x128xf32, #tpu.memory_space<vmem>>, vector<1x1x128xf32>
    %135 = vector.shape_cast %134 : vector<1x1x128xf32> to vector<1x128xf32>
    %c0_66 = arith.constant 0 : index
    %c0_67 = arith.constant 0 : index
    %c0_68 = arith.constant 0 : index
    %136 = vector.load %arg6[%c0_66, %c0_67, %c0_68] : memref<2x1x128xf32, #tpu.memory_space<vmem>>, vector<1x1x128xf32>
    %137 = vector.shape_cast %136 : vector<1x1x128xf32> to vector<1x128xf32>
    %138 = vector.extract_strided_slice %133 {offsets = [0, 0], sizes = [31, 128], strides = [1, 1]} : vector<32x128xf32> to vector<31x128xf32>
    %139 = tpu.concatenate %74, %138 in 0 : vector<1x128xf32>, vector<31x128xf32> -> vector<32x128xf32>
    %cst_69 = arith.constant 0.000000e+00 : f32
    %140 = vector.broadcast %cst_69 : f32 to vector<32x128xf32>
    %141 = arith.select %18, %140, %139 : vector<32x128xi1>, vector<32x128xf32>
    %142 = vector.extract_strided_slice %133 {offsets = [1, 0], sizes = [31, 128], strides = [1, 1]} : vector<32x128xf32> to vector<31x128xf32>
    %143 = tpu.concatenate %142, %74 in 0 : vector<31x128xf32>, vector<1x128xf32> -> vector<32x128xf32>
    %cst_70 = arith.constant 0.000000e+00 : f32
    %144 = vector.broadcast %cst_70 : f32 to vector<32x128xf32>
    %145 = arith.select %36, %144, %143 : vector<32x128xi1>, vector<32x128xf32>
    %cst_71 = arith.constant dense<0.000000e+00> : vector<32x128xf32>
    %146 = tpu.matmul %141, %83, %cst_71 {dimension_numbers = #tpu.dot_dimension_numbers<[1], [0], [0], [1], [0, 0, 1, 1], [], []>} : vector<32x128xf32>, vector<128x128xf32>, vector<32x128xf32> -> vector<32x128xf32>
    %cst_72 = arith.constant dense<0.000000e+00> : vector<32x128xf32>
    %147 = tpu.matmul %133, %85, %cst_72 {dimension_numbers = #tpu.dot_dimension_numbers<[1], [0], [0], [1], [0, 0, 1, 1], [], []>} : vector<32x128xf32>, vector<128x128xf32>, vector<32x128xf32> -> vector<32x128xf32>
    %148 = arith.addf %146, %147 : vector<32x128xf32>
    %cst_73 = arith.constant dense<0.000000e+00> : vector<32x128xf32>
    %149 = tpu.matmul %145, %87, %cst_73 {dimension_numbers = #tpu.dot_dimension_numbers<[1], [0], [0], [1], [0, 0, 1, 1], [], []>} : vector<32x128xf32>, vector<128x128xf32>, vector<32x128xf32> -> vector<32x128xf32>
    %150 = arith.addf %148, %149 : vector<32x128xf32>
    %cst_74 = arith.constant dense<0.000000e+00> : vector<128xf32>
    %151 = vector.multi_reduction <add>, %150, %cst_74 [0] : vector<32x128xf32> to vector<128xf32>
    %152 = vector.shape_cast %151 : vector<128xf32> to vector<1x128xf32>
    %153 = arith.mulf %150, %150 : vector<32x128xf32>
    %cst_75 = arith.constant dense<0.000000e+00> : vector<128xf32>
    %154 = vector.multi_reduction <add>, %153, %cst_75 [0] : vector<32x128xf32> to vector<128xf32>
    %155 = vector.shape_cast %154 : vector<128xf32> to vector<1x128xf32>
    %156 = tpu.concatenate %152, %155 in 0 : vector<1x128xf32>, vector<1x128xf32> -> vector<2x128xf32>
    %cst_76 = arith.constant dense<0.000000e+00> : vector<2x128xf32>
    %157 = tpu.matmul %156, %73, %cst_76 {dimension_numbers = #tpu.dot_dimension_numbers<[1], [0], [0], [1], [0, 0, 1, 1], [], []>} : vector<2x128xf32>, vector<128x128xf32>, vector<2x128xf32> -> vector<2x128xf32>
    %158 = vector.extract_strided_slice %157 {offsets = [0, 0], sizes = [1, 128], strides = [1, 1]} : vector<2x128xf32> to vector<1x128xf32>
    %cst_77 = arith.constant 0.001953125 : f32
    %159 = vector.broadcast %cst_77 : f32 to vector<1x128xf32>
    %160 = arith.mulf %158, %159 : vector<1x128xf32>
    %161 = vector.extract_strided_slice %157 {offsets = [1, 0], sizes = [1, 128], strides = [1, 1]} : vector<2x128xf32> to vector<1x128xf32>
    %cst_78 = arith.constant 0.001953125 : f32
    %162 = vector.broadcast %cst_78 : f32 to vector<1x128xf32>
    %163 = arith.mulf %161, %162 : vector<1x128xf32>
    %164 = arith.mulf %160, %160 : vector<1x128xf32>
    %165 = arith.subf %163, %164 : vector<1x128xf32>
    %cst_79 = arith.constant 0.000000e+00 : f32
    %166 = vector.broadcast %cst_79 : f32 to vector<1x128xf32>
    %167 = arith.maximumf %165, %166 : vector<1x128xf32>
    %cst_80 = arith.constant 9.99999974E-6 : f32
    %168 = vector.broadcast %cst_80 : f32 to vector<1x128xf32>
    %169 = arith.addf %167, %168 : vector<1x128xf32>
    %170 = math.rsqrt %169 : vector<1x128xf32>
    %171 = arith.mulf %135, %170 : vector<1x128xf32>
    %172 = arith.mulf %160, %171 : vector<1x128xf32>
    %173 = arith.subf %137, %172 : vector<1x128xf32>
    %174 = vector.broadcast %171 : vector<1x128xf32> to vector<32x128xf32>
    %175 = arith.mulf %150, %174 : vector<32x128xf32>
    %176 = vector.broadcast %173 : vector<1x128xf32> to vector<32x128xf32>
    %177 = arith.addf %175, %176 : vector<32x128xf32>
    %178 = arith.addf %177, %75 : vector<32x128xf32>
    %cst_81 = arith.constant 0.000000e+00 : f32
    %179 = vector.broadcast %cst_81 : f32 to vector<32x128xf32>
    %180 = arith.maximumf %178, %179 : vector<32x128xf32>
    %c1_82 = arith.constant 1 : index
    %c0_83 = arith.constant 0 : index
    %c0_84 = arith.constant 0 : index
    %c0_85 = arith.constant 0 : index
    %181 = vector.load %arg1[%c1_82, %c0_83, %c0_84, %c0_85] : memref<2x3x128x128xf32, #tpu.memory_space<vmem>>, vector<1x1x128x128xf32>
    %182 = vector.shape_cast %181 : vector<1x1x128x128xf32> to vector<128x128xf32>
    %c1_86 = arith.constant 1 : index
    %c1_87 = arith.constant 1 : index
    %c0_88 = arith.constant 0 : index
    %c0_89 = arith.constant 0 : index
    %183 = vector.load %arg1[%c1_86, %c1_87, %c0_88, %c0_89] : memref<2x3x128x128xf32, #tpu.memory_space<vmem>>, vector<1x1x128x128xf32>
    %184 = vector.shape_cast %183 : vector<1x1x128x128xf32> to vector<128x128xf32>
    %c1_90 = arith.constant 1 : index
    %c2_91 = arith.constant 2 : index
    %c0_92 = arith.constant 0 : index
    %c0_93 = arith.constant 0 : index
    %185 = vector.load %arg1[%c1_90, %c2_91, %c0_92, %c0_93] : memref<2x3x128x128xf32, #tpu.memory_space<vmem>>, vector<1x1x128x128xf32>
    %186 = vector.shape_cast %185 : vector<1x1x128x128xf32> to vector<128x128xf32>
    %c1_94 = arith.constant 1 : index
    %c0_95 = arith.constant 0 : index
    %c0_96 = arith.constant 0 : index
    %c0_97 = arith.constant 0 : index
    %187 = vector.load %arg4[%c1_94, %c0_95, %c0_96, %c0_97] : memref<2x3x128x128xf32, #tpu.memory_space<vmem>>, vector<1x1x128x128xf32>
    %188 = vector.shape_cast %187 : vector<1x1x128x128xf32> to vector<128x128xf32>
    %c1_98 = arith.constant 1 : index
    %c1_99 = arith.constant 1 : index
    %c0_100 = arith.constant 0 : index
    %c0_101 = arith.constant 0 : index
    %189 = vector.load %arg4[%c1_98, %c1_99, %c0_100, %c0_101] : memref<2x3x128x128xf32, #tpu.memory_space<vmem>>, vector<1x1x128x128xf32>
    %190 = vector.shape_cast %189 : vector<1x1x128x128xf32> to vector<128x128xf32>
    %c1_102 = arith.constant 1 : index
    %c2_103 = arith.constant 2 : index
    %c0_104 = arith.constant 0 : index
    %c0_105 = arith.constant 0 : index
    %191 = vector.load %arg4[%c1_102, %c2_103, %c0_104, %c0_105] : memref<2x3x128x128xf32, #tpu.memory_space<vmem>>, vector<1x1x128x128xf32>
    %192 = vector.shape_cast %191 : vector<1x1x128x128xf32> to vector<128x128xf32>
    %c1_106 = arith.constant 1 : index
    %c0_107 = arith.constant 0 : index
    %c0_108 = arith.constant 0 : index
    %193 = vector.load %arg2[%c1_106, %c0_107, %c0_108] : memref<2x1x128xf32, #tpu.memory_space<vmem>>, vector<1x1x128xf32>
    %194 = vector.shape_cast %193 : vector<1x1x128xf32> to vector<1x128xf32>
    %c1_109 = arith.constant 1 : index
    %c0_110 = arith.constant 0 : index
    %c0_111 = arith.constant 0 : index
    %195 = vector.load %arg3[%c1_109, %c0_110, %c0_111] : memref<2x1x128xf32, #tpu.memory_space<vmem>>, vector<1x1x128xf32>
    %196 = vector.shape_cast %195 : vector<1x1x128xf32> to vector<1x128xf32>
    %197 = vector.extract_strided_slice %180 {offsets = [0, 0], sizes = [31, 128], strides = [1, 1]} : vector<32x128xf32> to vector<31x128xf32>
    %198 = tpu.concatenate %74, %197 in 0 : vector<1x128xf32>, vector<31x128xf32> -> vector<32x128xf32>
    %cst_112 = arith.constant 0.000000e+00 : f32
    %199 = vector.broadcast %cst_112 : f32 to vector<32x128xf32>
    %200 = arith.select %18, %199, %198 : vector<32x128xi1>, vector<32x128xf32>
    %201 = vector.extract_strided_slice %180 {offsets = [1, 0], sizes = [31, 128], strides = [1, 1]} : vector<32x128xf32> to vector<31x128xf32>
    %202 = tpu.concatenate %201, %74 in 0 : vector<31x128xf32>, vector<1x128xf32> -> vector<32x128xf32>
    %cst_113 = arith.constant 0.000000e+00 : f32
    %203 = vector.broadcast %cst_113 : f32 to vector<32x128xf32>
    %204 = arith.select %36, %203, %202 : vector<32x128xi1>, vector<32x128xf32>
    %cst_114 = arith.constant dense<0.000000e+00> : vector<32x128xf32>
    %205 = tpu.matmul %200, %182, %cst_114 {dimension_numbers = #tpu.dot_dimension_numbers<[1], [0], [0], [1], [0, 0, 1, 1], [], []>} : vector<32x128xf32>, vector<128x128xf32>, vector<32x128xf32> -> vector<32x128xf32>
    %cst_115 = arith.constant dense<0.000000e+00> : vector<32x128xf32>
    %206 = tpu.matmul %180, %184, %cst_115 {dimension_numbers = #tpu.dot_dimension_numbers<[1], [0], [0], [1], [0, 0, 1, 1], [], []>} : vector<32x128xf32>, vector<128x128xf32>, vector<32x128xf32> -> vector<32x128xf32>
    %207 = arith.addf %205, %206 : vector<32x128xf32>
    %cst_116 = arith.constant dense<0.000000e+00> : vector<32x128xf32>
    %208 = tpu.matmul %204, %186, %cst_116 {dimension_numbers = #tpu.dot_dimension_numbers<[1], [0], [0], [1], [0, 0, 1, 1], [], []>} : vector<32x128xf32>, vector<128x128xf32>, vector<32x128xf32> -> vector<32x128xf32>
    %209 = arith.addf %207, %208 : vector<32x128xf32>
    %cst_117 = arith.constant dense<0.000000e+00> : vector<128xf32>
    %210 = vector.multi_reduction <add>, %209, %cst_117 [0] : vector<32x128xf32> to vector<128xf32>
    %211 = vector.shape_cast %210 : vector<128xf32> to vector<1x128xf32>
    %212 = arith.mulf %209, %209 : vector<32x128xf32>
    %cst_118 = arith.constant dense<0.000000e+00> : vector<128xf32>
    %213 = vector.multi_reduction <add>, %212, %cst_118 [0] : vector<32x128xf32> to vector<128xf32>
    %214 = vector.shape_cast %213 : vector<128xf32> to vector<1x128xf32>
    %215 = tpu.concatenate %211, %214 in 0 : vector<1x128xf32>, vector<1x128xf32> -> vector<2x128xf32>
    %cst_119 = arith.constant dense<0.000000e+00> : vector<2x128xf32>
    %216 = tpu.matmul %215, %73, %cst_119 {dimension_numbers = #tpu.dot_dimension_numbers<[1], [0], [0], [1], [0, 0, 1, 1], [], []>} : vector<2x128xf32>, vector<128x128xf32>, vector<2x128xf32> -> vector<2x128xf32>
    %217 = vector.extract_strided_slice %216 {offsets = [0, 0], sizes = [1, 128], strides = [1, 1]} : vector<2x128xf32> to vector<1x128xf32>
    %cst_120 = arith.constant 0.001953125 : f32
    %218 = vector.broadcast %cst_120 : f32 to vector<1x128xf32>
    %219 = arith.mulf %217, %218 : vector<1x128xf32>
    %220 = vector.extract_strided_slice %216 {offsets = [1, 0], sizes = [1, 128], strides = [1, 1]} : vector<2x128xf32> to vector<1x128xf32>
    %cst_121 = arith.constant 0.001953125 : f32
    %221 = vector.broadcast %cst_121 : f32 to vector<1x128xf32>
    %222 = arith.mulf %220, %221 : vector<1x128xf32>
    %223 = arith.mulf %219, %219 : vector<1x128xf32>
    %224 = arith.subf %222, %223 : vector<1x128xf32>
    %cst_122 = arith.constant 0.000000e+00 : f32
    %225 = vector.broadcast %cst_122 : f32 to vector<1x128xf32>
    %226 = arith.maximumf %224, %225 : vector<1x128xf32>
    %cst_123 = arith.constant 9.99999974E-6 : f32
    %227 = vector.broadcast %cst_123 : f32 to vector<1x128xf32>
    %228 = arith.addf %226, %227 : vector<1x128xf32>
    %229 = math.rsqrt %228 : vector<1x128xf32>
    %230 = arith.mulf %194, %229 : vector<1x128xf32>
    %231 = arith.mulf %219, %230 : vector<1x128xf32>
    %232 = arith.subf %196, %231 : vector<1x128xf32>
    %233 = vector.broadcast %230 : vector<1x128xf32> to vector<32x128xf32>
    %234 = arith.mulf %209, %233 : vector<32x128xf32>
    %235 = vector.broadcast %232 : vector<1x128xf32> to vector<32x128xf32>
    %236 = arith.addf %234, %235 : vector<32x128xf32>
    %cst_124 = arith.constant 0.000000e+00 : f32
    %237 = vector.broadcast %cst_124 : f32 to vector<32x128xf32>
    %238 = arith.maximumf %236, %237 : vector<32x128xf32>
    %c1_125 = arith.constant 1 : index
    %c0_126 = arith.constant 0 : index
    %c0_127 = arith.constant 0 : index
    %239 = vector.load %arg5[%c1_125, %c0_126, %c0_127] : memref<2x1x128xf32, #tpu.memory_space<vmem>>, vector<1x1x128xf32>
    %240 = vector.shape_cast %239 : vector<1x1x128xf32> to vector<1x128xf32>
    %c1_128 = arith.constant 1 : index
    %c0_129 = arith.constant 0 : index
    %c0_130 = arith.constant 0 : index
    %241 = vector.load %arg6[%c1_128, %c0_129, %c0_130] : memref<2x1x128xf32, #tpu.memory_space<vmem>>, vector<1x1x128xf32>
    %242 = vector.shape_cast %241 : vector<1x1x128xf32> to vector<1x128xf32>
    %243 = vector.extract_strided_slice %238 {offsets = [0, 0], sizes = [31, 128], strides = [1, 1]} : vector<32x128xf32> to vector<31x128xf32>
    %244 = tpu.concatenate %74, %243 in 0 : vector<1x128xf32>, vector<31x128xf32> -> vector<32x128xf32>
    %cst_131 = arith.constant 0.000000e+00 : f32
    %245 = vector.broadcast %cst_131 : f32 to vector<32x128xf32>
    %246 = arith.select %18, %245, %244 : vector<32x128xi1>, vector<32x128xf32>
    %247 = vector.extract_strided_slice %238 {offsets = [1, 0], sizes = [31, 128], strides = [1, 1]} : vector<32x128xf32> to vector<31x128xf32>
    %248 = tpu.concatenate %247, %74 in 0 : vector<31x128xf32>, vector<1x128xf32> -> vector<32x128xf32>
    %cst_132 = arith.constant 0.000000e+00 : f32
    %249 = vector.broadcast %cst_132 : f32 to vector<32x128xf32>
    %250 = arith.select %36, %249, %248 : vector<32x128xi1>, vector<32x128xf32>
    %cst_133 = arith.constant dense<0.000000e+00> : vector<32x128xf32>
    %251 = tpu.matmul %246, %188, %cst_133 {dimension_numbers = #tpu.dot_dimension_numbers<[1], [0], [0], [1], [0, 0, 1, 1], [], []>} : vector<32x128xf32>, vector<128x128xf32>, vector<32x128xf32> -> vector<32x128xf32>
    %cst_134 = arith.constant dense<0.000000e+00> : vector<32x128xf32>
    %252 = tpu.matmul %238, %190, %cst_134 {dimension_numbers = #tpu.dot_dimension_numbers<[1], [0], [0], [1], [0, 0, 1, 1], [], []>} : vector<32x128xf32>, vector<128x128xf32>, vector<32x128xf32> -> vector<32x128xf32>
    %253 = arith.addf %251, %252 : vector<32x128xf32>
    %cst_135 = arith.constant dense<0.000000e+00> : vector<32x128xf32>
    %254 = tpu.matmul %250, %192, %cst_135 {dimension_numbers = #tpu.dot_dimension_numbers<[1], [0], [0], [1], [0, 0, 1, 1], [], []>} : vector<32x128xf32>, vector<128x128xf32>, vector<32x128xf32> -> vector<32x128xf32>
    %255 = arith.addf %253, %254 : vector<32x128xf32>
    %cst_136 = arith.constant dense<0.000000e+00> : vector<128xf32>
    %256 = vector.multi_reduction <add>, %255, %cst_136 [0] : vector<32x128xf32> to vector<128xf32>
    %257 = vector.shape_cast %256 : vector<128xf32> to vector<1x128xf32>
    %258 = arith.mulf %255, %255 : vector<32x128xf32>
    %cst_137 = arith.constant dense<0.000000e+00> : vector<128xf32>
    %259 = vector.multi_reduction <add>, %258, %cst_137 [0] : vector<32x128xf32> to vector<128xf32>
    %260 = vector.shape_cast %259 : vector<128xf32> to vector<1x128xf32>
    %261 = tpu.concatenate %257, %260 in 0 : vector<1x128xf32>, vector<1x128xf32> -> vector<2x128xf32>
    %cst_138 = arith.constant dense<0.000000e+00> : vector<2x128xf32>
    %262 = tpu.matmul %261, %73, %cst_138 {dimension_numbers = #tpu.dot_dimension_numbers<[1], [0], [0], [1], [0, 0, 1, 1], [], []>} : vector<2x128xf32>, vector<128x128xf32>, vector<2x128xf32> -> vector<2x128xf32>
    %263 = vector.extract_strided_slice %262 {offsets = [0, 0], sizes = [1, 128], strides = [1, 1]} : vector<2x128xf32> to vector<1x128xf32>
    %cst_139 = arith.constant 0.001953125 : f32
    %264 = vector.broadcast %cst_139 : f32 to vector<1x128xf32>
    %265 = arith.mulf %263, %264 : vector<1x128xf32>
    %266 = vector.extract_strided_slice %262 {offsets = [1, 0], sizes = [1, 128], strides = [1, 1]} : vector<2x128xf32> to vector<1x128xf32>
    %cst_140 = arith.constant 0.001953125 : f32
    %267 = vector.broadcast %cst_140 : f32 to vector<1x128xf32>
    %268 = arith.mulf %266, %267 : vector<1x128xf32>
    %269 = arith.mulf %265, %265 : vector<1x128xf32>
    %270 = arith.subf %268, %269 : vector<1x128xf32>
    %cst_141 = arith.constant 0.000000e+00 : f32
    %271 = vector.broadcast %cst_141 : f32 to vector<1x128xf32>
    %272 = arith.maximumf %270, %271 : vector<1x128xf32>
    %cst_142 = arith.constant 9.99999974E-6 : f32
    %273 = vector.broadcast %cst_142 : f32 to vector<1x128xf32>
    %274 = arith.addf %272, %273 : vector<1x128xf32>
    %275 = math.rsqrt %274 : vector<1x128xf32>
    %276 = arith.mulf %240, %275 : vector<1x128xf32>
    %277 = arith.mulf %265, %276 : vector<1x128xf32>
    %278 = arith.subf %242, %277 : vector<1x128xf32>
    %279 = vector.broadcast %276 : vector<1x128xf32> to vector<32x128xf32>
    %280 = arith.mulf %255, %279 : vector<32x128xf32>
    %281 = vector.broadcast %278 : vector<1x128xf32> to vector<32x128xf32>
    %282 = arith.addf %280, %281 : vector<32x128xf32>
    %283 = arith.addf %282, %180 : vector<32x128xf32>
    %cst_143 = arith.constant 0.000000e+00 : f32
    %284 = vector.broadcast %cst_143 : f32 to vector<32x128xf32>
    %285 = arith.maximumf %283, %284 : vector<32x128xf32>
    %c0_144 = arith.constant 0 : index
    %c0_145 = arith.constant 0 : index
    %286 = vector.load %arg7[%c0_144, %c0_145] : memref<32x128xf32, #tpu.memory_space<vmem>>, vector<32x128xf32>
    tpu.vector_store %arg7[%c0_144, %c0_145], %285 {strides = array<i32>} : memref<32x128xf32, #tpu.memory_space<vmem>>, vector<32x128xf32>,
    return
  }
}

</mosaic_0001>

<llo_original>
// kernel: tpu_custom_call.1
$region0: #{tpu_custom_call.1}
  #allocation0 [shape = 'u32[]', space=smem, size = 0x4, offset = 0x4, fixed_abs, tag = 'smem constant byte address 0x4 - core index']
  #allocation1 [shape = 'u32[72,128]{1,0:T(1,128)}', space=vmem, size = 0x9000, scoped, tag = 'internal scratch']
  %s0 = inlined_call_operand.hbm [shape: f32[32,128], index: 0, kind: input, shape index: {}]
  %s1 = inlined_call_operand.hbm [shape: f32[2,3,128,128], index: 1, kind: input, shape index: {}]
  %s2 = inlined_call_operand.hbm [shape: f32[2,1,128], index: 2, kind: input, shape index: {}]
  %s3 = inlined_call_operand.vmem [shape: f32[2,1,128], index: 3, kind: input, shape index: {}]
  %s4 = inlined_call_operand.hbm [shape: f32[2,3,128,128], index: 4, kind: input, shape index: {}]
  %s5 = inlined_call_operand.vmem [shape: f32[2,1,128], index: 5, kind: input, shape index: {}]
  %s6 = inlined_call_operand.hbm [shape: f32[2,1,128], index: 6, kind: input, shape index: {}]
  %s7 = inlined_call_operand.hbm [shape: f32[32,128], index: 7, kind: output, shape index: {}]
  %s8 = sld [smem:[#allocation0]]
  $region58: #{tpu_custom_call.1} parent=0
    _
  %s10 = ssub.s32 1, %s8
  %s11 = scalar_select 0, %s10, %s8
  $region1: #{tpu_custom_call.1} parent=0
    #allocation2 [shape = 'u8[16384]{0}', space=vmem, size = 0x4000, scoped, tag = 'input window, operand 0, single buffered']
    #allocation3 [shape = 's32[1]{0}', space=sflag, size = 0x4, scoped, tag = 'scoped memory for tpu_custom_call.1']
    #allocation4 [shape = 's32[1]{0}', space=sflag, size = 0x4, scoped, tag = 'scoped memory for tpu_custom_call.1']
    #allocation5 [shape = 'u8[393216]{0}', space=vmem, size = 0x60000, scoped, tag = 'input window, operand 1, single buffered']
    #allocation6 [shape = 's32[1]{0}', space=sflag, size = 0x4, scoped, tag = 'scoped memory for tpu_custom_call.1']
    #allocation7 [shape = 'u8[1024]{0}', space=vmem, size = 0x400, scoped, tag = 'input window, operand 2, single buffered']
    #allocation8 [shape = 'u8[393216]{0}', space=vmem, size = 0x60000, scoped, tag = 'input window, operand 4, single buffered']
    #allocation9 [shape = 's32[1]{0}', space=sflag, size = 0x4, scoped, tag = 'scoped memory for tpu_custom_call.1']
    #allocation10 [shape = 'u8[1024]{0}', space=vmem, size = 0x400, scoped, tag = 'input window, operand 6, single buffered']
    #allocation11 [shape = 'u8[16384]{0}', space=vmem, size = 0x4000, scoped, tag = 'output window, operand 0, single buffered']
    %12 = vsyncpa [#allocation3], 0
    %13 = vsyncpa [#allocation6], 0
    %14 = vsyncpa [#allocation9], 0
    %15 = vsyncpa [#allocation4], 0
    // Predicated region
    $region2: #{tpu_custom_call.1} parent=1 // pred_check
      _
    $region3: #{tpu_custom_call.1} parent=1 // pred_check_branch
      %17 = sbr.rel (0) target = $region5
    $region4: #{tpu_custom_call.1} parent=1 // pred_region
      %19 = vsyncadd [#allocation3], 0
      %s20 = sshll.u32 %s0, 4
      %s21 = int_to_ptr.hbm [resolvable:$true] %s20
      %s22 = sshll.u32 [#allocation2], 4
      %s23 = int_to_ptr.vmem [resolvable:$true] %s22
      %28 = dma.hbm_to_vmem [thread:$0]  %s21, 512, %s23, [#allocation3], 128, 128, 8
    $region5: #{tpu_custom_call.1} parent=1 // pred_fallthru
      _
    // Predicated region
    $region6: #{tpu_custom_call.1} parent=1 // pred_check
      _
    $region7: #{tpu_custom_call.1} parent=1 // pred_check_branch
      %30 = sbr.rel (0) target = $region9
    $region8: #{tpu_custom_call.1} parent=1 // pred_region
      %32 = vsyncadd [#allocation6], 0
      %s33 = sshll.u32 %s1, 4
      %s34 = int_to_ptr.hbm [resolvable:$true] %s33
      %s35 = sshll.u32 [#allocation5], 4
      %s36 = int_to_ptr.vmem [resolvable:$true] %s35
      %41 = dma.hbm_to_vmem [thread:$0]  %s34, 12288, %s36, [#allocation6], 128, 128, 8
    $region9: #{tpu_custom_call.1} parent=1 // pred_fallthru
      _
    // Predicated region
    $region10: #{tpu_custom_call.1} parent=1 // pred_check
      _
    $region11: #{tpu_custom_call.1} parent=1 // pred_check_branch
      %43 = sbr.rel (0) target = $region13
    $region12: #{tpu_custom_call.1} parent=1 // pred_region
      %45 = vsyncadd [#allocation6], 0
      %s46 = sshll.u32 %s2, 4
      %s47 = int_to_ptr.hbm [resolvable:$true] %s46
      %s48 = sshll.u32 [#allocation7], 4
      %s49 = int_to_ptr.vmem [resolvable:$true] %s48
      %54 = dma.hbm_to_vmem [thread:$0]  %s47, 32, %s49, [#allocation6], 16, 16, 1
    $region13: #{tpu_custom_call.1} parent=1 // pred_fallthru
      _
    // Predicated region
    $region14: #{tpu_custom_call.1} parent=1 // pred_check
      _
    $region15: #{tpu_custom_call.1} parent=1 // pred_check_branch
      %56 = sbr.rel (0) target = $region17
    $region16: #{tpu_custom_call.1} parent=1 // pred_region
      _
    $region17: #{tpu_custom_call.1} parent=1 // pred_fallthru
      _
    // Predicated region
    $region18: #{tpu_custom_call.1} parent=1 // pred_check
      _
    $region19: #{tpu_custom_call.1} parent=1 // pred_check_branch
      %58 = sbr.rel (0) target = $region21
    $region20: #{tpu_custom_call.1} parent=1 // pred_region
      %60 = vsyncadd [#allocation9], 0
      %s61 = sshll.u32 %s4, 4
      %s62 = int_to_ptr.hbm [resolvable:$true] %s61
      %s63 = sshll.u32 [#allocation8], 4
      %s64 = int_to_ptr.vmem [resolvable:$true] %s63
      %69 = dma.hbm_to_vmem [thread:$0]  %s62, 12288, %s64, [#allocation9], 128, 128, 8
    $region21: #{tpu_custom_call.1} parent=1 // pred_fallthru
      _
    // Predicated region
    $region22: #{tpu_custom_call.1} parent=1 // pred_check
      _
    $region23: #{tpu_custom_call.1} parent=1 // pred_check_branch
      %71 = sbr.rel (0) target = $region25
    $region24: #{tpu_custom_call.1} parent=1 // pred_region
      _
    $region25: #{tpu_custom_call.1} parent=1 // pred_fallthru
      _
    // Predicated region
    $region26: #{tpu_custom_call.1} parent=1 // pred_check
      _
    $region27: #{tpu_custom_call.1} parent=1 // pred_check_branch
      %73 = sbr.rel (0) target = $region29
    $region28: #{tpu_custom_call.1} parent=1 // pred_region
      %75 = vsyncadd [#allocation9], 0
      %s76 = sshll.u32 %s6, 4
      %s77 = int_to_ptr.hbm [resolvable:$true] %s76
      %s78 = sshll.u32 [#allocation10], 4
      %s79 = int_to_ptr.vmem [resolvable:$true] %s78
      %84 = dma.hbm_to_vmem [thread:$0]  %s77, 32, %s79, [#allocation9], 16, 16, 1
    $region29: #{tpu_custom_call.1} parent=1 // pred_fallthru
      _
    // Predicated region
    $region30: #{tpu_custom_call.1} parent=1 // pred_check
      _
    $region31: #{tpu_custom_call.1} parent=1 // pred_check_branch
      %86 = sbr.rel (0) target = $region33
    $region32: #{tpu_custom_call.1} parent=1 // pred_region
      %88 = dma.done [#allocation3], 512
    $region33: #{tpu_custom_call.1} parent=1 // pred_fallthru
      _
    // Predicated region
    $region34: #{tpu_custom_call.1} parent=1 // pred_check
      _
    $region35: #{tpu_custom_call.1} parent=1 // pred_check_branch
      %90 = sbr.rel (0) target = $region37
    $region36: #{tpu_custom_call.1} parent=1 // pred_region
      %92 = dma.done [#allocation6], 12288
    $region37: #{tpu_custom_call.1} parent=1 // pred_fallthru
      _
    // Predicated region
    $region38: #{tpu_custom_call.1} parent=1 // pred_check
      _
    $region39: #{tpu_custom_call.1} parent=1 // pred_check_branch
      %94 = sbr.rel (0) target = $region41
    $region40: #{tpu_custom_call.1} parent=1 // pred_region
      %96 = dma.done [#allocation6], 32
    $region41: #{tpu_custom_call.1} parent=1 // pred_fallthru
      _
    // Predicated region
    $region42: #{tpu_custom_call.1} parent=1 // pred_check
      _
    $region43: #{tpu_custom_call.1} parent=1 // pred_check_branch
      %98 = sbr.rel (0) target = $region45
    $region44: #{tpu_custom_call.1} parent=1 // pred_region
      %100 = dma.done [#allocation9], 12288
    $region45: #{tpu_custom_call.1} parent=1 // pred_fallthru
      _
    // Predicated region
    $region46: #{tpu_custom_call.1} parent=1 // pred_check
      _
    $region47: #{tpu_custom_call.1} parent=1 // pred_check_branch
      %102 = sbr.rel (0) target = $region49
    $region48: #{tpu_custom_call.1} parent=1 // pred_region
      %104 = dma.done [#allocation9], 32
    $region49: #{tpu_custom_call.1} parent=1 // pred_fallthru
      _
    %v105 = vlaneseq
    %v106 = vshrl.u32 %v105, 7
    %v107 = vadd.s32 %v106, 8
    %v108 = vadd.s32 %v106, 16
    %v109 = vadd.s32 %v106, 24
    %vm110 = vcmp.lt.s32.totalorder %v106, 0
    %v111 = vsub.s32 0, %v106
    %v112 = vsel %vm110, %v111, %v106
    %v113 = vshrl.u32 %v112, 4
    %v114 = vand.u32 %v112, 15
    %v115 = vsub.s32 0, %v114
    %v116 = vsel %vm110, %v115, %v114
    %vm117 = vcmp.lt.s32.totalorder %v107, 0
    %v118 = vsub.s32 0, %v107
    %v119 = vsel %vm117, %v118, %v107
    %v120 = vshrl.u32 %v119, 4
    %v121 = vand.u32 %v119, 15
    %v122 = vsub.s32 0, %v121
    %v123 = vsel %vm117, %v122, %v121
    %vm124 = vcmp.lt.s32.totalorder %v108, 0
    %v125 = vsub.s32 0, %v108
    %v126 = vsel %vm124, %v125, %v108
    %v127 = vshrl.u32 %v126, 4
    %v128 = vand.u32 %v126, 15
    %v129 = vsub.s32 0, %v128
    %v130 = vsel %vm124, %v129, %v128
    %vm131 = vcmp.lt.s32.totalorder %v109, 0
    %v132 = vsub.s32 0, %v109
    %v133 = vsel %vm131, %v132, %v109
    %v134 = vshrl.u32 %v133, 4
    %v135 = vand.u32 %v133, 15
    %v136 = vsub.s32 0, %v135
    %v137 = vsel %vm131, %v136, %v135
    %vm138 = vcmp.ne.s32.totalorder %v116, 0
    %vm139 = vcmp.ne.s32.totalorder %v123, 0
    %vm140 = vcmp.ne.s32.totalorder %v130, 0
    %vm141 = vcmp.ne.s32.totalorder %v137, 0
    %vm142 = vcmp.lt.s32.totalorder %v116, 0
    %vm143 = vcmp.lt.s32.totalorder %v123, 0
    %vm144 = vcmp.lt.s32.totalorder %v130, 0
    %vm145 = vcmp.lt.s32.totalorder %v137, 0
    %vm146 = vmand %vm142, %vm138
    %vm147 = vmand %vm143, %vm139
    %vm148 = vmand %vm144, %vm140
    %vm149 = vmand %vm145, %vm141
    %v150 = vadd.s32 %v116, 16
    %v151 = vadd.s32 %v123, 16
    %v152 = vadd.s32 %v130, 16
    %v153 = vadd.s32 %v137, 16
    %v154 = vsel %vm146, %v150, %v116
    %v155 = vsel %vm147, %v151, %v123
    %v156 = vsel %vm148, %v152, %v130
    %v157 = vsel %vm149, %v153, %v137
    %vm158 = vcmp.eq.s32.totalorder %v154, 0
    %vm159 = vcmp.eq.s32.totalorder %v155, 0
    %vm160 = vcmp.eq.s32.totalorder %v156, 0
    %vm161 = vcmp.eq.s32.totalorder %v157, 0
    %vm162 = vcmp.eq.s32.totalorder %v154, 15
    %vm163 = vcmp.eq.s32.totalorder %v155, 15
    %vm164 = vcmp.eq.s32.totalorder %v156, 15
    %vm165 = vcmp.eq.s32.totalorder %v157, 15
    %v166 = vadd.s32 %v106, 32
    %v167 = vadd.s32 %v106, 40
    %v168 = vadd.s32 %v106, 48
    %v169 = vadd.s32 %v106, 56
    %v170 = vadd.s32 %v106, 64
    %v171 = vadd.s32 %v106, 72
    %v172 = vadd.s32 %v106, 80
    %v173 = vadd.s32 %v106, 88
    %v174 = vadd.s32 %v106, 96
    %v175 = vadd.s32 %v106, 104
    %v176 = vadd.s32 %v106, 112
    %v177 = vadd.s32 %v106, 120
    %v178 = vlaneseq
    %v179 = vand.u32 %v178, 127
    %vm180 = vcmp.lt.s32.totalorder %v106, 0
    %v181 = vsub.s32 0, %v106
    %v182 = vsel %vm180, %v181, %v106
    %v183 = vshrl.u32 %v182, 3
    %v184 = vand.u32 %v182, 7
    %v185 = vsub.s32 0, %v184
    %v186 = vsel %vm180, %v185, %v184
    %vm187 = vcmp.lt.s32.totalorder %v107, 0
    %v188 = vsub.s32 0, %v107
    %v189 = vsel %vm187, %v188, %v107
    %v190 = vshrl.u32 %v189, 3
    %v191 = vand.u32 %v189, 7
    %v192 = vsub.s32 0, %v191
    %v193 = vsel %vm187, %v192, %v191
    %vm194 = vcmp.lt.s32.totalorder %v108, 0
    %v195 = vsub.s32 0, %v108
    %v196 = vsel %vm194, %v195, %v108
    %v197 = vshrl.u32 %v196, 3
    %v198 = vand.u32 %v196, 7
    %v199 = vsub.s32 0, %v198
    %v200 = vsel %vm194, %v199, %v198
    %vm201 = vcmp.lt.s32.totalorder %v109, 0
    %v202 = vsub.s32 0, %v109
    %v203 = vsel %vm201, %v202, %v109
    %v204 = vshrl.u32 %v203, 3
    %v205 = vand.u32 %v203, 7
    %v206 = vsub.s32 0, %v205
    %v207 = vsel %vm201, %v206, %v205
    %vm208 = vcmp.lt.s32.totalorder %v166, 0
    %v209 = vsub.s32 0, %v166
    %v210 = vsel %vm208, %v209, %v166
    %v211 = vshrl.u32 %v210, 3
    %v212 = vand.u32 %v210, 7
    %v213 = vsub.s32 0, %v212
    %v214 = vsel %vm208, %v213, %v212
    %vm215 = vcmp.lt.s32.totalorder %v167, 0
    %v216 = vsub.s32 0, %v167
    %v217 = vsel %vm215, %v216, %v167
    %v218 = vshrl.u32 %v217, 3
    %v219 = vand.u32 %v217, 7
    %v220 = vsub.s32 0, %v219
    %v221 = vsel %vm215, %v220, %v219
    %vm222 = vcmp.lt.s32.totalorder %v168, 0
    %v223 = vsub.s32 0, %v168
    %v224 = vsel %vm222, %v223, %v168
    %v225 = vshrl.u32 %v224, 3
    %v226 = vand.u32 %v224, 7
    %v227 = vsub.s32 0, %v226
    %v228 = vsel %vm222, %v227, %v226
    %vm229 = vcmp.lt.s32.totalorder %v169, 0
    %v230 = vsub.s32 0, %v169
    %v231 = vsel %vm229, %v230, %v169
    %v232 = vshrl.u32 %v231, 3
    %v233 = vand.u32 %v231, 7
    %v234 = vsub.s32 0, %v233
    %v235 = vsel %vm229, %v234, %v233
    %vm236 = vcmp.lt.s32.totalorder %v170, 0
    %v237 = vsub.s32 0, %v170
    %v238 = vsel %vm236, %v237, %v170
    %v239 = vshrl.u32 %v238, 3
    %v240 = vand.u32 %v238, 7
    %v241 = vsub.s32 0, %v240
    %v242 = vsel %vm236, %v241, %v240
    %vm243 = vcmp.lt.s32.totalorder %v171, 0
    %v244 = vsub.s32 0, %v171
    %v245 = vsel %vm243, %v244, %v171
    %v246 = vshrl.u32 %v245, 3
    %v247 = vand.u32 %v245, 7
    %v248 = vsub.s32 0, %v247
    %v249 = vsel %vm243, %v248, %v247
    %vm250 = vcmp.lt.s32.totalorder %v172, 0
    %v251 = vsub.s32 0, %v172
    %v252 = vsel %vm250, %v251, %v172
    %v253 = vshrl.u32 %v252, 3
    %v254 = vand.u32 %v252, 7
    %v255 = vsub.s32 0, %v254
    %v256 = vsel %vm250, %v255, %v254
    %vm257 = vcmp.lt.s32.totalorder %v173, 0
    %v258 = vsub.s32 0, %v173
    %v259 = vsel %vm257, %v258, %v173
    %v260 = vshrl.u32 %v259, 3
    %v261 = vand.u32 %v259, 7
    %v262 = vsub.s32 0, %v261
    %v263 = vsel %vm257, %v262, %v261
    %vm264 = vcmp.lt.s32.totalorder %v174, 0
    %v265 = vsub.s32 0, %v174
    %v266 = vsel %vm264, %v265, %v174
    %v267 = vshrl.u32 %v266, 3
    %v268 = vand.u32 %v266, 7
    %v269 = vsub.s32 0, %v268
    %v270 = vsel %vm264, %v269, %v268
    %vm271 = vcmp.lt.s32.totalorder %v175, 0
    %v272 = vsub.s32 0, %v175
    %v273 = vsel %vm271, %v272, %v175
    %v274 = vshrl.u32 %v273, 3
    %v275 = vand.u32 %v273, 7
    %v276 = vsub.s32 0, %v275
    %v277 = vsel %vm271, %v276, %v275
    %vm278 = vcmp.lt.s32.totalorder %v176, 0
    %v279 = vsub.s32 0, %v176
    %v280 = vsel %vm278, %v279, %v176
    %v281 = vshrl.u32 %v280, 3
    %v282 = vand.u32 %v280, 7
    %v283 = vsub.s32 0, %v282
    %v284 = vsel %vm278, %v283, %v282
    %vm285 = vcmp.lt.s32.totalorder %v177, 0
    %v286 = vsub.s32 0, %v177
    %v287 = vsel %vm285, %v286, %v177
    %v288 = vshrl.u32 %v287, 3
    %v289 = vand.u32 %v287, 7
    %v290 = vsub.s32 0, %v289
    %v291 = vsel %vm285, %v290, %v289
    %vm292 = vcmp.ne.s32.totalorder %v186, 0
    %vm293 = vcmp.ne.s32.totalorder %v193, 0
    %vm294 = vcmp.ne.s32.totalorder %v200, 0
    %vm295 = vcmp.ne.s32.totalorder %v207, 0
    %vm296 = vcmp.ne.s32.totalorder %v214, 0
    %vm297 = vcmp.ne.s32.totalorder %v221, 0
    %vm298 = vcmp.ne.s32.totalorder %v228, 0
    %vm299 = vcmp.ne.s32.totalorder %v235, 0
    %vm300 = vcmp.ne.s32.totalorder %v242, 0
    %vm301 = vcmp.ne.s32.totalorder %v249, 0
    %vm302 = vcmp.ne.s32.totalorder %v256, 0
    %vm303 = vcmp.ne.s32.totalorder %v263, 0
    %vm304 = vcmp.ne.s32.totalorder %v270, 0
    %vm305 = vcmp.ne.s32.totalorder %v277, 0
    %vm306 = vcmp.ne.s32.totalorder %v284, 0
    %vm307 = vcmp.ne.s32.totalorder %v291, 0
    %vm308 = vcmp.lt.s32.totalorder %v186, 0
    %vm309 = vcmp.lt.s32.totalorder %v193, 0
    %vm310 = vcmp.lt.s32.totalorder %v200, 0
    %vm311 = vcmp.lt.s32.totalorder %v207, 0
    %vm312 = vcmp.lt.s32.totalorder %v214, 0
    %vm313 = vcmp.lt.s32.totalorder %v221, 0
    %vm314 = vcmp.lt.s32.totalorder %v228, 0
    %vm315 = vcmp.lt.s32.totalorder %v235, 0
    %vm316 = vcmp.lt.s32.totalorder %v242, 0
    %vm317 = vcmp.lt.s32.totalorder %v249, 0
    %vm318 = vcmp.lt.s32.totalorder %v256, 0
    %vm319 = vcmp.lt.s32.totalorder %v263, 0
    %vm320 = vcmp.lt.s32.totalorder %v270, 0
    %vm321 = vcmp.lt.s32.totalorder %v277, 0
    %vm322 = vcmp.lt.s32.totalorder %v284, 0
    %vm323 = vcmp.lt.s32.totalorder %v291, 0
    %vm324 = vmand %vm308, %vm292
    %vm325 = vmand %vm309, %vm293
    %vm326 = vmand %vm310, %vm294
    %vm327 = vmand %vm311, %vm295
    %vm328 = vmand %vm312, %vm296
    %vm329 = vmand %vm313, %vm297
    %vm330 = vmand %vm314, %vm298
    %vm331 = vmand %vm315, %vm299
    %vm332 = vmand %vm316, %vm300
    %vm333 = vmand %vm317, %vm301
    %vm334 = vmand %vm318, %vm302
    %vm335 = vmand %vm319, %vm303
    %vm336 = vmand %vm320, %vm304
    %vm337 = vmand %vm321, %vm305
    %vm338 = vmand %vm322, %vm306
    %vm339 = vmand %vm323, %vm307
    %v340 = vadd.s32 %v186, 8
    %v341 = vadd.s32 %v193, 8
    %v342 = vadd.s32 %v200, 8
    %v343 = vadd.s32 %v207, 8
    %v344 = vadd.s32 %v214, 8
    %v345 = vadd.s32 %v221, 8
    %v346 = vadd.s32 %v228, 8
    %v347 = vadd.s32 %v235, 8
    %v348 = vadd.s32 %v242, 8
    %v349 = vadd.s32 %v249, 8
    %v350 = vadd.s32 %v256, 8
    %v351 = vadd.s32 %v263, 8
    %v352 = vadd.s32 %v270, 8
    %v353 = vadd.s32 %v277, 8
    %v354 = vadd.s32 %v284, 8
    %v355 = vadd.s32 %v291, 8
    %v356 = vsel %vm324, %v340, %v186
    %v357 = vsel %vm325, %v341, %v193
    %v358 = vsel %vm326, %v342, %v200
    %v359 = vsel %vm327, %v343, %v207
    %v360 = vsel %vm328, %v344, %v214
    %v361 = vsel %vm329, %v345, %v221
    %v362 = vsel %vm330, %v346, %v228
    %v363 = vsel %vm331, %v347, %v235
    %v364 = vsel %vm332, %v348, %v242
    %v365 = vsel %vm333, %v349, %v249
    %v366 = vsel %vm334, %v350, %v256
    %v367 = vsel %vm335, %v351, %v263
    %v368 = vsel %vm336, %v352, %v270
    %v369 = vsel %vm337, %v353, %v277
    %v370 = vsel %vm338, %v354, %v284
    %v371 = vsel %vm339, %v355, %v291
    %vm372 = vcmp.lt.s32.totalorder %v179, 0
    %v373 = vsub.s32 0, %v179
    %v374 = vsel %vm372, %v373, %v179
    %v375 = vshrl.u32 %v374, 3
    %v376 = vand.u32 %v374, 7
    %v377 = vsub.s32 0, %v376
    %v378 = vsel %vm372, %v377, %v376
    %vm379 = vcmp.ne.s32.totalorder %v378, 0
    %vm380 = vcmp.lt.s32.totalorder %v378, 0
    %vm381 = vmand %vm380, %vm379
    %v382 = vadd.s32 %v378, 8
    %v383 = vsel %vm381, %v382, %v378
    %vm384 = vcmp.eq.s32.totalorder %v356, %v383
    %vm385 = vcmp.eq.s32.totalorder %v357, %v383
    %vm386 = vcmp.eq.s32.totalorder %v358, %v383
    %vm387 = vcmp.eq.s32.totalorder %v359, %v383
    %vm388 = vcmp.eq.s32.totalorder %v360, %v383
    %vm389 = vcmp.eq.s32.totalorder %v361, %v383
    %vm390 = vcmp.eq.s32.totalorder %v362, %v383
    %vm391 = vcmp.eq.s32.totalorder %v363, %v383
    %vm392 = vcmp.eq.s32.totalorder %v364, %v383
    %vm393 = vcmp.eq.s32.totalorder %v365, %v383
    %vm394 = vcmp.eq.s32.totalorder %v366, %v383
    %vm395 = vcmp.eq.s32.totalorder %v367, %v383
    %vm396 = vcmp.eq.s32.totalorder %v368, %v383
    %vm397 = vcmp.eq.s32.totalorder %v369, %v383
    %vm398 = vcmp.eq.s32.totalorder %v370, %v383
    %vm399 = vcmp.eq.s32.totalorder %v371, %v383
    %v400 = vsel %vm384, 1, 0
    %v401 = vsel %vm385, 1, 0
    %v402 = vsel %vm386, 1, 0
    %v403 = vsel %vm387, 1, 0
    %v404 = vsel %vm388, 1, 0
    %v405 = vsel %vm389, 1, 0
    %v406 = vsel %vm390, 1, 0
    %v407 = vsel %vm391, 1, 0
    %v408 = vsel %vm392, 1, 0
    %v409 = vsel %vm393, 1, 0
    %v410 = vsel %vm394, 1, 0
    %v411 = vsel %vm395, 1, 0
    %v412 = vsel %vm396, 1, 0
    %v413 = vsel %vm397, 1, 0
    %v414 = vsel %vm398, 1, 0
    %v415 = vsel %vm399, 1, 0
    %v416 = vcvt.s32.f32 %v400
    %v417 = vcvt.s32.f32 %v401
    %v418 = vcvt.s32.f32 %v402
    %v419 = vcvt.s32.f32 %v403
    %v420 = vcvt.s32.f32 %v404
    %v421 = vcvt.s32.f32 %v405
    %v422 = vcvt.s32.f32 %v406
    %v423 = vcvt.s32.f32 %v407
    %v424 = vcvt.s32.f32 %v408
    %v425 = vcvt.s32.f32 %v409
    %v426 = vcvt.s32.f32 %v410
    %v427 = vcvt.s32.f32 %v411
    %v428 = vcvt.s32.f32 %v412
    %v429 = vcvt.s32.f32 %v413
    %v430 = vcvt.s32.f32 %v414
    %v431 = vcvt.s32.f32 %v415
    %v432 = vld [vmem:[#allocation2] sm:$0xff]
    %v433 = vld [vmem:[#allocation2 + $0x8] sm:$0xff]
    %v434 = vld [vmem:[#allocation2 + $0x10] sm:$0xff]
    %v435 = vld [vmem:[#allocation2 + $0x18] sm:$0xff]
    %v436 = vld [vmem:[#allocation5] sm:$0xff]
    %v437 = vld [vmem:[#allocation5 + $0x8] sm:$0xff]
    %v438 = vld [vmem:[#allocation5 + $0x10] sm:$0xff]
    %v439 = vld [vmem:[#allocation5 + $0x18] sm:$0xff]
    %v440 = vld [vmem:[#allocation5 + $0x20] sm:$0xff]
    %v441 = vld [vmem:[#allocation5 + $0x28] sm:$0xff]
    %v442 = vld [vmem:[#allocation5 + $0x30] sm:$0xff]
    %v443 = vld [vmem:[#allocation5 + $0x38] sm:$0xff]
    %v444 = vld [vmem:[#allocation5 + $0x40] sm:$0xff]
    %v445 = vld [vmem:[#allocation5 + $0x48] sm:$0xff]
    %v446 = vld [vmem:[#allocation5 + $0x50] sm:$0xff]
    %v447 = vld [vmem:[#allocation5 + $0x58] sm:$0xff]
    %v448 = vld [vmem:[#allocation5 + $0x60] sm:$0xff]
    %v449 = vld [vmem:[#allocation5 + $0x68] sm:$0xff]
    %v450 = vld [vmem:[#allocation5 + $0x70] sm:$0xff]
    %v451 = vld [vmem:[#allocation5 + $0x78] sm:$0xff]
    %s452 = scalar_lea.vmem [#allocation5], 128
    %v453 = vld [vmem:[%s452] sm:$0xff]
    %v454 = vld [vmem:[%s452 + $0x8] sm:$0xff]
    %v455 = vld [vmem:[%s452 + $0x10] sm:$0xff]
    %v456 = vld [vmem:[%s452 + $0x18] sm:$0xff]
    %v457 = vld [vmem:[%s452 + $0x20] sm:$0xff]
    %v458 = vld [vmem:[%s452 + $0x28] sm:$0xff]
    %v459 = vld [vmem:[%s452 + $0x30] sm:$0xff]
    %v460 = vld [vmem:[%s452 + $0x38] sm:$0xff]
    %v461 = vld [vmem:[%s452 + $0x40] sm:$0xff]
    %v462 = vld [vmem:[%s452 + $0x48] sm:$0xff]
    %v463 = vld [vmem:[%s452 + $0x50] sm:$0xff]
    %v464 = vld [vmem:[%s452 + $0x58] sm:$0xff]
    %v465 = vld [vmem:[%s452 + $0x60] sm:$0xff]
    %v466 = vld [vmem:[%s452 + $0x68] sm:$0xff]
    %v467 = vld [vmem:[%s452 + $0x70] sm:$0xff]
    %v468 = vld [vmem:[%s452 + $0x78] sm:$0xff]
    %s469 = scalar_lea.vmem [#allocation5], 256
    %v470 = vld [vmem:[%s469] sm:$0xff]
    %v471 = vld [vmem:[%s469 + $0x8] sm:$0xff]
    %v472 = vld [vmem:[%s469 + $0x10] sm:$0xff]
    %v473 = vld [vmem:[%s469 + $0x18] sm:$0xff]
    %v474 = vld [vmem:[%s469 + $0x20] sm:$0xff]
    %v475 = vld [vmem:[%s469 + $0x28] sm:$0xff]
    %v476 = vld [vmem:[%s469 + $0x30] sm:$0xff]
    %v477 = vld [vmem:[%s469 + $0x38] sm:$0xff]
    %v478 = vld [vmem:[%s469 + $0x40] sm:$0xff]
    %v479 = vld [vmem:[%s469 + $0x48] sm:$0xff]
    %v480 = vld [vmem:[%s469 + $0x50] sm:$0xff]
    %v481 = vld [vmem:[%s469 + $0x58] sm:$0xff]
    %v482 = vld [vmem:[%s469 + $0x60] sm:$0xff]
    %v483 = vld [vmem:[%s469 + $0x68] sm:$0xff]
    %v484 = vld [vmem:[%s469 + $0x70] sm:$0xff]
    %v485 = vld [vmem:[%s469 + $0x78] sm:$0xff]
    %v486 = vld [vmem:[#allocation8] sm:$0xff]
    %v487 = vld [vmem:[#allocation8 + $0x8] sm:$0xff]
    %v488 = vld [vmem:[#allocation8 + $0x10] sm:$0xff]
    %v489 = vld [vmem:[#allocation8 + $0x18] sm:$0xff]
    %v490 = vld [vmem:[#allocation8 + $0x20] sm:$0xff]
    %v491 = vld [vmem:[#allocation8 + $0x28] sm:$0xff]
    %v492 = vld [vmem:[#allocation8 + $0x30] sm:$0xff]
    %v493 = vld [vmem:[#allocation8 + $0x38] sm:$0xff]
    %v494 = vld [vmem:[#allocation8 + $0x40] sm:$0xff]
    %v495 = vld [vmem:[#allocation8 + $0x48] sm:$0xff]
    %v496 = vld [vmem:[#allocation8 + $0x50] sm:$0xff]
    %v497 = vld [vmem:[#allocation8 + $0x58] sm:$0xff]
    %v498 = vld [vmem:[#allocation8 + $0x60] sm:$0xff]
    %v499 = vld [vmem:[#allocation8 + $0x68] sm:$0xff]
    %v500 = vld [vmem:[#allocation8 + $0x70] sm:$0xff]
    %v501 = vld [vmem:[#allocation8 + $0x78] sm:$0xff]
    %s502 = scalar_lea.vmem [#allocation8], 128
    %v503 = vld [vmem:[%s502] sm:$0xff]
    %v504 = vld [vmem:[%s502 + $0x8] sm:$0xff]
    %v505 = vld [vmem:[%s502 + $0x10] sm:$0xff]
    %v506 = vld [vmem:[%s502 + $0x18] sm:$0xff]
    %v507 = vld [vmem:[%s502 + $0x20] sm:$0xff]
    %v508 = vld [vmem:[%s502 + $0x28] sm:$0xff]
    %v509 = vld [vmem:[%s502 + $0x30] sm:$0xff]
    %v510 = vld [vmem:[%s502 + $0x38] sm:$0xff]
    %v511 = vld [vmem:[%s502 + $0x40] sm:$0xff]
    %v512 = vld [vmem:[%s502 + $0x48] sm:$0xff]
    %v513 = vld [vmem:[%s502 + $0x50] sm:$0xff]
    %v514 = vld [vmem:[%s502 + $0x58] sm:$0xff]
    %v515 = vld [vmem:[%s502 + $0x60] sm:$0xff]
    %v516 = vld [vmem:[%s502 + $0x68] sm:$0xff]
    %v517 = vld [vmem:[%s502 + $0x70] sm:$0xff]
    %v518 = vld [vmem:[%s502 + $0x78] sm:$0xff]
    %s519 = scalar_lea.vmem [#allocation8], 256
    %v520 = vld [vmem:[%s519] sm:$0xff]
    %v521 = vld [vmem:[%s519 + $0x8] sm:$0xff]
    %v522 = vld [vmem:[%s519 + $0x10] sm:$0xff]
    %v523 = vld [vmem:[%s519 + $0x18] sm:$0xff]
    %v524 = vld [vmem:[%s519 + $0x20] sm:$0xff]
    %v525 = vld [vmem:[%s519 + $0x28] sm:$0xff]
    %v526 = vld [vmem:[%s519 + $0x30] sm:$0xff]
    %v527 = vld [vmem:[%s519 + $0x38] sm:$0xff]
    %v528 = vld [vmem:[%s519 + $0x40] sm:$0xff]
    %v529 = vld [vmem:[%s519 + $0x48] sm:$0xff]
    %v530 = vld [vmem:[%s519 + $0x50] sm:$0xff]
    %v531 = vld [vmem:[%s519 + $0x58] sm:$0xff]
    %v532 = vld [vmem:[%s519 + $0x60] sm:$0xff]
    %v533 = vld [vmem:[%s519 + $0x68] sm:$0xff]
    %v534 = vld [vmem:[%s519 + $0x70] sm:$0xff]
    %v535 = vld [vmem:[%s519 + $0x78] sm:$0xff]
    %v536 = vld [vmem:[#allocation7] sm:$0x1]
    %v537 = vld [vmem:[%s3] sm:$0x1]
    %vm542 = vcmask 1040384
    %v543 = vrot.slane %v432, 7
    %v544 = vrot.slane %v433, 7
    %v545 = vsel %vm542, %v543, %v544
    %v546 = vrot.slane %v434, 7
    %v547 = vsel %vm542, %v544, %v546
    %v548 = vrot.slane %v435, 7
    %v549 = vsel %vm542, %v546, %v548
    %v554 = vsel %vm542, 0.0, %v543
    %v555 = vsel %vm158, 0.0, %v554
    %v556 = vsel %vm159, 0.0, %v545
    %v557 = vsel %vm160, 0.0, %v547
    %v558 = vsel %vm161, 0.0, %v549
    %vm559 = vcmask 1046528
    %v560 = vrot.slane %v432, 1
    %v561 = vrot.slane %v433, 1
    %v562 = vsel %vm559, %v560, %v561
    %v563 = vrot.slane %v434, 1
    %v564 = vsel %vm559, %v561, %v563
    %v565 = vrot.slane %v435, 1
    %v566 = vsel %vm559, %v563, %v565
    %v571 = vsel %vm559, %v565, 0.0
    %v572 = vsel %vm162, 0.0, %v562
    %v573 = vsel %vm163, 0.0, %v564
    %v574 = vsel %vm164, 0.0, %v566
    %v575 = vsel %vm165, 0.0, %v571
    %576 = vmatpush.msra.mxu0 %v468
    %577 = vmatpush.msra.mxu0 %v467
    %578 = vmatpush.msra.mxu0 %v466
    %579 = vmatpush.msra.mxu0 %v465
    %580 = vmatpush.msra.mxu0 %v464
    %581 = vmatpush.msra.mxu0 %v463
    %582 = vmatpush.msra.mxu0 %v462
    %583 = vmatpush.msra.mxu0 %v461
    %584 = vmatpush.msra.mxu0 %v460
    %585 = vmatpush.msra.mxu0 %v459
    %586 = vmatpush.msra.mxu0 %v458
    %587 = vmatpush.msra.mxu0 %v457
    %588 = vmatpush.msra.mxu0 %v456
    %589 = vmatpush.msra.mxu0 %v455
    %590 = vmatpush.msra.mxu0 %v454
    %591 = vmatpush.msra.mxu0 %v453
    %592 = vmatmul.f32.gmra.mxu0 %v432
    %v593 = vpop.f32.mrf.mxu0
    %v594 = vadd.f32 0.0, %v593
    %595 = vmatmul.f32.gmra.mxu0 %v433
    %v596 = vpop.f32.mrf.mxu0
    %v597 = vadd.f32 0.0, %v596
    %598 = vmatmul.f32.gmra.mxu0 %v434
    %v599 = vpop.f32.mrf.mxu0
    %v600 = vadd.f32 0.0, %v599
    %601 = vmatmul.f32.gmra.mxu0 %v435
    %v602 = vpop.f32.mrf.mxu0
    %v603 = vadd.f32 0.0, %v602
    %604 = vdwg.mxu0
    %605 = vmatpush.msra.mxu0 %v451
    %606 = vmatpush.msra.mxu0 %v450
    %607 = vmatpush.msra.mxu0 %v449
    %608 = vmatpush.msra.mxu0 %v448
    %609 = vmatpush.msra.mxu0 %v447
    %610 = vmatpush.msra.mxu0 %v446
    %611 = vmatpush.msra.mxu0 %v445
    %612 = vmatpush.msra.mxu0 %v444
    %613 = vmatpush.msra.mxu0 %v443
    %614 = vmatpush.msra.mxu0 %v442
    %615 = vmatpush.msra.mxu0 %v441
    %616 = vmatpush.msra.mxu0 %v440
    %617 = vmatpush.msra.mxu0 %v439
    %618 = vmatpush.msra.mxu0 %v438
    %619 = vmatpush.msra.mxu0 %v437
    %620 = vmatpush.msra.mxu0 %v436
    %621 = vmatmul.f32.gmra.mxu0 %v555
    %v622 = vpop.f32.mrf.mxu0
    %v623 = vadd.f32 %v594, %v622
    %624 = vmatmul.f32.gmra.mxu0 %v556
    %v625 = vpop.f32.mrf.mxu0
    %v626 = vadd.f32 %v597, %v625
    %627 = vmatmul.f32.gmra.mxu0 %v557
    %v628 = vpop.f32.mrf.mxu0
    %v629 = vadd.f32 %v600, %v628
    %630 = vmatmul.f32.gmra.mxu0 %v558
    %v631 = vpop.f32.mrf.mxu0
    %v632 = vadd.f32 %v603, %v631
    %633 = vdwg.mxu0
    %634 = vmatpush.msra.mxu0 %v485
    %635 = vmatpush.msra.mxu0 %v484
    %636 = vmatpush.msra.mxu0 %v483
    %637 = vmatpush.msra.mxu0 %v482
    %638 = vmatpush.msra.mxu0 %v481
    %639 = vmatpush.msra.mxu0 %v480
    %640 = vmatpush.msra.mxu0 %v479
    %641 = vmatpush.msra.mxu0 %v478
    %642 = vmatpush.msra.mxu0 %v477
    %643 = vmatpush.msra.mxu0 %v476
    %644 = vmatpush.msra.mxu0 %v475
    %645 = vmatpush.msra.mxu0 %v474
    %646 = vmatpush.msra.mxu0 %v473
    %647 = vmatpush.msra.mxu0 %v472
    %648 = vmatpush.msra.mxu0 %v471
    %649 = vmatpush.msra.mxu0 %v470
    %650 = vmatmul.f32.gmra.mxu0 %v572
    %v651 = vpop.f32.mrf.mxu0
    %v652 = vadd.f32 0.0, %v651
    %653 = vmatmul.f32.gmra.mxu0 %v573
    %v654 = vpop.f32.mrf.mxu0
    %v655 = vadd.f32 0.0, %v654
    %656 = vmatmul.f32.gmra.mxu0 %v574
    %v657 = vpop.f32.mrf.mxu0
    %v658 = vadd.f32 0.0, %v657
    %659 = vmatmul.f32.gmra.mxu0 %v575
    %v660 = vpop.f32.mrf.mxu0
    %v661 = vadd.f32 0.0, %v660
    %662 = vdwg.mxu0
    %v663 = vadd.f32 %v623, %v652
    %v664 = vadd.f32 %v626, %v655
    %v665 = vadd.f32 %v629, %v658
    %v666 = vadd.f32 %v632, %v661
    %v667 = vadd.f32 %v663, %v664
    %v668 = vadd.f32 %v667, %v665
    %v669 = vadd.f32 %v668, %v666
    %v670 = vrot.slane %v669, 4
    %v671 = vadd.f32 %v669, %v670
    %v672 = vrot.slane %v671, 2
    %v673 = vadd.f32 %v671, %v672
    %v674 = vrot.slane %v673, 1
    %v675 = vadd.f32 %v673, %v674
    %v676 = vmul.f32 %v663, %v663
    %v677 = vmul.f32 %v664, %v664
    %v678 = vmul.f32 %v665, %v665
    %v679 = vmul.f32 %v666, %v666
    %v680 = vadd.f32 %v676, %v677
    %v681 = vadd.f32 %v680, %v678
    %v682 = vadd.f32 %v681, %v679
    %v683 = vrot.slane %v682, 4
    %v684 = vadd.f32 %v682, %v683
    %v685 = vrot.slane %v684, 2
    %v686 = vadd.f32 %v684, %v685
    %v687 = vrot.slane %v686, 1
    %v688 = vadd.f32 %v686, %v687
    %v689 = vsel %vm542, %v675, %v688
    %690 = vmatpush.msra.mxu0 %v431
    %691 = vmatpush.msra.mxu0 %v430
    %692 = vmatpush.msra.mxu0 %v429
    %693 = vmatpush.msra.mxu0 %v428
    %694 = vmatpush.msra.mxu0 %v427
    %695 = vmatpush.msra.mxu0 %v426
    %696 = vmatpush.msra.mxu0 %v425
    %697 = vmatpush.msra.mxu0 %v424
    %698 = vmatpush.msra.mxu0 %v423
    %699 = vmatpush.msra.mxu0 %v422
    %700 = vmatpush.msra.mxu0 %v421
    %701 = vmatpush.msra.mxu0 %v420
    %702 = vmatpush.msra.mxu0 %v419
    %703 = vmatpush.msra.mxu0 %v418
    %704 = vmatpush.msra.mxu0 %v417
    %705 = vmatpush.msra.mxu0 %v416
    %706 = vmatmul.f32.gmra.mxu0 %v689
    %v707 = vpop.f32.mrf.mxu0
    %v708 = vadd.f32 0.0, %v707
    %709 = vdwg.mxu0
    %v710 = vmul.f32 %v708, 0.001953125
    %v711 = vmul.f32 %v710, %v710
    %v713 = vrot.slane %v711, 7
    %v715 = vsub.f32 %v710, %v713
    %v716 = vmax.f32 %v715, 0.0
    %v717 = vadd.f32 %v716, 1e-05
    %v718 = vrsqrt.pop %v717
    %v719 = vmul.f32 %v718, %v717
    %v720 = vmul.f32 %v719, %v718
    %v721 = vmul.f32 0.5, %v720
    %v722 = vsub.f32 1.5, %v721
    %v723 = vmul.f32 %v718, %v722
    %vm724 = vweird.f32 %v717
    %vm725 = vweird.f32 %v718
    %vm726 = vmor %vm724, %vm725
    %v727 = vsel %vm726, %v718, %v723
    %729 = vst [vmem:[#allocation1] sm:$0xff] %v727
    %s730 = scalar_lea.vmem [#allocation1], 1
    %v731 = vld [vmem:[%s730] ss:$9 sm:$0xff]
    %v733 = vmul.f32 %v536, %v731
    %v734 = vmul.f32 %v710, %v733
    %v735 = vsub.f32 %v537, %v734
    %v737 = vperm.slane %v733, 0
    %v739 = vmul.f32 %v663, %v737
    %v740 = vmul.f32 %v664, %v737
    %v741 = vmul.f32 %v665, %v737
    %v742 = vmul.f32 %v666, %v737
    %v744 = vperm.slane %v735, 0
    %v746 = vadd.f32 %v739, %v744
    %v747 = vadd.f32 %v740, %v744
    %v748 = vadd.f32 %v741, %v744
    %v749 = vadd.f32 %v742, %v744
    %v750 = vmax.f32 %v746, 0.0
    %v751 = vmax.f32 %v747, 0.0
    %v752 = vmax.f32 %v748, 0.0
    %v753 = vmax.f32 %v749, 0.0
    %v754 = vld [vmem:[%s5] sm:$0x1]
    %v755 = vld [vmem:[#allocation10] sm:$0x1]
    %v760 = vrot.slane %v750, 7
    %v761 = vrot.slane %v751, 7
    %v762 = vsel %vm542, %v760, %v761
    %v763 = vrot.slane %v752, 7
    %v764 = vsel %vm542, %v761, %v763
    %v765 = vrot.slane %v753, 7
    %v766 = vsel %vm542, %v763, %v765
    %v771 = vsel %vm542, 0.0, %v760
    %v772 = vsel %vm158, 0.0, %v771
    %v773 = vsel %vm159, 0.0, %v762
    %v774 = vsel %vm160, 0.0, %v764
    %v775 = vsel %vm161, 0.0, %v766
    %v776 = vrot.slane %v750, 1
    %v777 = vrot.slane %v751, 1
    %v778 = vsel %vm559, %v776, %v777
    %v779 = vrot.slane %v752, 1
    %v780 = vsel %vm559, %v777, %v779
    %v781 = vrot.slane %v753, 1
    %v782 = vsel %vm559, %v779, %v781
    %v787 = vsel %vm559, %v781, 0.0
    %v788 = vsel %vm162, 0.0, %v778
    %v789 = vsel %vm163, 0.0, %v780
    %v790 = vsel %vm164, 0.0, %v782
    %v791 = vsel %vm165, 0.0, %v787
    %792 = vmatpush.msra.mxu0 %v518
    %793 = vmatpush.msra.mxu0 %v517
    %794 = vmatpush.msra.mxu0 %v516
    %795 = vmatpush.msra.mxu0 %v515
    %796 = vmatpush.msra.mxu0 %v514
    %797 = vmatpush.msra.mxu0 %v513
    %798 = vmatpush.msra.mxu0 %v512
    %799 = vmatpush.msra.mxu0 %v511
    %800 = vmatpush.msra.mxu0 %v510
    %801 = vmatpush.msra.mxu0 %v509
    %802 = vmatpush.msra.mxu0 %v508
    %803 = vmatpush.msra.mxu0 %v507
    %804 = vmatpush.msra.mxu0 %v506
    %805 = vmatpush.msra.mxu0 %v505
    %806 = vmatpush.msra.mxu0 %v504
    %807 = vmatpush.msra.mxu0 %v503
    %808 = vmatmul.f32.gmra.mxu0 %v750
    %v809 = vpop.f32.mrf.mxu0
    %v810 = vadd.f32 0.0, %v809
    %811 = vmatmul.f32.gmra.mxu0 %v751
    %v812 = vpop.f32.mrf.mxu0
    %v813 = vadd.f32 0.0, %v812
    %814 = vmatmul.f32.gmra.mxu0 %v752
    %v815 = vpop.f32.mrf.mxu0
    %v816 = vadd.f32 0.0, %v815
    %817 = vmatmul.f32.gmra.mxu0 %v753
    %v818 = vpop.f32.mrf.mxu0
    %v819 = vadd.f32 0.0, %v818
    %820 = vdwg.mxu0
    %821 = vmatpush.msra.mxu0 %v501
    %822 = vmatpush.msra.mxu0 %v500
    %823 = vmatpush.msra.mxu0 %v499
    %824 = vmatpush.msra.mxu0 %v498
    %825 = vmatpush.msra.mxu0 %v497
    %826 = vmatpush.msra.mxu0 %v496
    %827 = vmatpush.msra.mxu0 %v495
    %828 = vmatpush.msra.mxu0 %v494
    %829 = vmatpush.msra.mxu0 %v493
    %830 = vmatpush.msra.mxu0 %v492
    %831 = vmatpush.msra.mxu0 %v491
    %832 = vmatpush.msra.mxu0 %v490
    %833 = vmatpush.msra.mxu0 %v489
    %834 = vmatpush.msra.mxu0 %v488
    %835 = vmatpush.msra.mxu0 %v487
    %836 = vmatpush.msra.mxu0 %v486
    %837 = vmatmul.f32.gmra.mxu0 %v772
    %v838 = vpop.f32.mrf.mxu0
    %v839 = vadd.f32 %v810, %v838
    %840 = vmatmul.f32.gmra.mxu0 %v773
    %v841 = vpop.f32.mrf.mxu0
    %v842 = vadd.f32 %v813, %v841
    %843 = vmatmul.f32.gmra.mxu0 %v774
    %v844 = vpop.f32.mrf.mxu0
    %v845 = vadd.f32 %v816, %v844
    %846 = vmatmul.f32.gmra.mxu0 %v775
    %v847 = vpop.f32.mrf.mxu0
    %v848 = vadd.f32 %v819, %v847
    %849 = vdwg.mxu0
    %850 = vmatpush.msra.mxu0 %v535
    %851 = vmatpush.msra.mxu0 %v534
    %852 = vmatpush.msra.mxu0 %v533
    %853 = vmatpush.msra.mxu0 %v532
    %854 = vmatpush.msra.mxu0 %v531
    %855 = vmatpush.msra.mxu0 %v530
    %856 = vmatpush.msra.mxu0 %v529
    %857 = vmatpush.msra.mxu0 %v528
    %858 = vmatpush.msra.mxu0 %v527
    %859 = vmatpush.msra.mxu0 %v526
    %860 = vmatpush.msra.mxu0 %v525
    %861 = vmatpush.msra.mxu0 %v524
    %862 = vmatpush.msra.mxu0 %v523
    %863 = vmatpush.msra.mxu0 %v522
    %864 = vmatpush.msra.mxu0 %v521
    %865 = vmatpush.msra.mxu0 %v520
    %866 = vmatmul.f32.gmra.mxu0 %v788
    %v867 = vpop.f32.mrf.mxu0
    %v868 = vadd.f32 0.0, %v867
    %869 = vmatmul.f32.gmra.mxu0 %v789
    %v870 = vpop.f32.mrf.mxu0
    %v871 = vadd.f32 0.0, %v870
    %872 = vmatmul.f32.gmra.mxu0 %v790
    %v873 = vpop.f32.mrf.mxu0
    %v874 = vadd.f32 0.0, %v873
    %875 = vmatmul.f32.gmra.mxu0 %v791
    %v876 = vpop.f32.mrf.mxu0
    %v877 = vadd.f32 0.0, %v876
    %878 = vdwg.mxu0
    %v879 = vadd.f32 %v839, %v868
    %v880 = vadd.f32 %v842, %v871
    %v881 = vadd.f32 %v845, %v874
    %v882 = vadd.f32 %v848, %v877
    %v883 = vadd.f32 %v879, %v880
    %v884 = vadd.f32 %v883, %v881
    %v885 = vadd.f32 %v884, %v882
    %v886 = vrot.slane %v885, 4
    %v887 = vadd.f32 %v885, %v886
    %v888 = vrot.slane %v887, 2
    %v889 = vadd.f32 %v887, %v888
    %v890 = vrot.slane %v889, 1
    %v891 = vadd.f32 %v889, %v890
    %v892 = vmul.f32 %v879, %v879
    %v893 = vmul.f32 %v880, %v880
    %v894 = vmul.f32 %v881, %v881
    %v895 = vmul.f32 %v882, %v882
    %v896 = vadd.f32 %v892, %v893
    %v897 = vadd.f32 %v896, %v894
    %v898 = vadd.f32 %v897, %v895
    %v899 = vrot.slane %v898, 4
    %v900 = vadd.f32 %v898, %v899
    %v901 = vrot.slane %v900, 2
    %v902 = vadd.f32 %v900, %v901
    %v903 = vrot.slane %v902, 1
    %v904 = vadd.f32 %v902, %v903
    %v905 = vsel %vm542, %v891, %v904
    %906 = vmatpush.msra.mxu0 %v431
    %907 = vmatpush.msra.mxu0 %v430
    %908 = vmatpush.msra.mxu0 %v429
    %909 = vmatpush.msra.mxu0 %v428
    %910 = vmatpush.msra.mxu0 %v427
    %911 = vmatpush.msra.mxu0 %v426
    %912 = vmatpush.msra.mxu0 %v425
    %913 = vmatpush.msra.mxu0 %v424
    %914 = vmatpush.msra.mxu0 %v423
    %915 = vmatpush.msra.mxu0 %v422
    %916 = vmatpush.msra.mxu0 %v421
    %917 = vmatpush.msra.mxu0 %v420
    %918 = vmatpush.msra.mxu0 %v419
    %919 = vmatpush.msra.mxu0 %v418
    %920 = vmatpush.msra.mxu0 %v417
    %921 = vmatpush.msra.mxu0 %v416
    %922 = vmatmul.f32.gmra.mxu0 %v905
    %v923 = vpop.f32.mrf.mxu0
    %v924 = vadd.f32 0.0, %v923
    %925 = vdwg.mxu0
    %v926 = vmul.f32 %v924, 0.001953125
    %v927 = vmul.f32 %v926, %v926
    %v929 = vrot.slane %v927, 7
    %v931 = vsub.f32 %v926, %v929
    %v932 = vmax.f32 %v931, 0.0
    %v933 = vadd.f32 %v932, 1e-05
    %v934 = vrsqrt.pop %v933
    %v935 = vmul.f32 %v934, %v933
    %v936 = vmul.f32 %v935, %v934
    %v937 = vmul.f32 0.5, %v936
    %v938 = vsub.f32 1.5, %v937
    %v939 = vmul.f32 %v934, %v938
    %vm940 = vweird.f32 %v933
    %vm941 = vweird.f32 %v934
    %vm942 = vmor %vm940, %vm941
    %v943 = vsel %vm942, %v934, %v939
    %945 = vst [vmem:[#allocation1] sm:$0xff] %v943
    %s946 = scalar_lea.vmem [#allocation1], 1
    %v947 = vld [vmem:[%s946] ss:$9 sm:$0xff]
    %v949 = vmul.f32 %v754, %v947
    %v950 = vmul.f32 %v926, %v949
    %v951 = vsub.f32 %v755, %v950
    %v953 = vperm.slane %v949, 0
    %v955 = vmul.f32 %v879, %v953
    %v956 = vmul.f32 %v880, %v953
    %v957 = vmul.f32 %v881, %v953
    %v958 = vmul.f32 %v882, %v953
    %v960 = vperm.slane %v951, 0
    %v962 = vadd.f32 %v955, %v960
    %v963 = vadd.f32 %v956, %v960
    %v964 = vadd.f32 %v957, %v960
    %v965 = vadd.f32 %v958, %v960
    %v966 = vadd.f32 %v962, %v432
    %v967 = vadd.f32 %v963, %v433
    %v968 = vadd.f32 %v964, %v434
    %v969 = vadd.f32 %v965, %v435
    %v970 = vmax.f32 %v966, 0.0
    %v971 = vmax.f32 %v967, 0.0
    %v972 = vmax.f32 %v968, 0.0
    %v973 = vmax.f32 %v969, 0.0
    %s974 = scalar_lea.vmem [#allocation5], 384
    %v975 = vld [vmem:[%s974] sm:$0xff]
    %v976 = vld [vmem:[%s974 + $0x8] sm:$0xff]
    %v977 = vld [vmem:[%s974 + $0x10] sm:$0xff]
    %v978 = vld [vmem:[%s974 + $0x18] sm:$0xff]
    %v979 = vld [vmem:[%s974 + $0x20] sm:$0xff]
    %v980 = vld [vmem:[%s974 + $0x28] sm:$0xff]
    %v981 = vld [vmem:[%s974 + $0x30] sm:$0xff]
    %v982 = vld [vmem:[%s974 + $0x38] sm:$0xff]
    %v983 = vld [vmem:[%s974 + $0x40] sm:$0xff]
    %v984 = vld [vmem:[%s974 + $0x48] sm:$0xff]
    %v985 = vld [vmem:[%s974 + $0x50] sm:$0xff]
    %v986 = vld [vmem:[%s974 + $0x58] sm:$0xff]
    %v987 = vld [vmem:[%s974 + $0x60] sm:$0xff]
    %v988 = vld [vmem:[%s974 + $0x68] sm:$0xff]
    %v989 = vld [vmem:[%s974 + $0x70] sm:$0xff]
    %v990 = vld [vmem:[%s974 + $0x78] sm:$0xff]
    %s991 = scalar_lea.vmem [#allocation5], 512
    %v992 = vld [vmem:[%s991] sm:$0xff]
    %v993 = vld [vmem:[%s991 + $0x8] sm:$0xff]
    %v994 = vld [vmem:[%s991 + $0x10] sm:$0xff]
    %v995 = vld [vmem:[%s991 + $0x18] sm:$0xff]
    %v996 = vld [vmem:[%s991 + $0x20] sm:$0xff]
    %v997 = vld [vmem:[%s991 + $0x28] sm:$0xff]
    %v998 = vld [vmem:[%s991 + $0x30] sm:$0xff]
    %v999 = vld [vmem:[%s991 + $0x38] sm:$0xff]
    %v1000 = vld [vmem:[%s991 + $0x40] sm:$0xff]
    %v1001 = vld [vmem:[%s991 + $0x48] sm:$0xff]
    %v1002 = vld [vmem:[%s991 + $0x50] sm:$0xff]
    %v1003 = vld [vmem:[%s991 + $0x58] sm:$0xff]
    %v1004 = vld [vmem:[%s991 + $0x60] sm:$0xff]
    %v1005 = vld [vmem:[%s991 + $0x68] sm:$0xff]
    %v1006 = vld [vmem:[%s991 + $0x70] sm:$0xff]
    %v1007 = vld [vmem:[%s991 + $0x78] sm:$0xff]
    %s1008 = scalar_lea.vmem [#allocation5], 640
    %v1009 = vld [vmem:[%s1008] sm:$0xff]
    %v1010 = vld [vmem:[%s1008 + $0x8] sm:$0xff]
    %v1011 = vld [vmem:[%s1008 + $0x10] sm:$0xff]
    %v1012 = vld [vmem:[%s1008 + $0x18] sm:$0xff]
    %v1013 = vld [vmem:[%s1008 + $0x20] sm:$0xff]
    %v1014 = vld [vmem:[%s1008 + $0x28] sm:$0xff]
    %v1015 = vld [vmem:[%s1008 + $0x30] sm:$0xff]
    %v1016 = vld [vmem:[%s1008 + $0x38] sm:$0xff]
    %v1017 = vld [vmem:[%s1008 + $0x40] sm:$0xff]
    %v1018 = vld [vmem:[%s1008 + $0x48] sm:$0xff]
    %v1019 = vld [vmem:[%s1008 + $0x50] sm:$0xff]
    %v1020 = vld [vmem:[%s1008 + $0x58] sm:$0xff]
    %v1021 = vld [vmem:[%s1008 + $0x60] sm:$0xff]
    %v1022 = vld [vmem:[%s1008 + $0x68] sm:$0xff]
    %v1023 = vld [vmem:[%s1008 + $0x70] sm:$0xff]
    %v1024 = vld [vmem:[%s1008 + $0x78] sm:$0xff]
    %s1025 = scalar_lea.vmem [#allocation8], 384
    %v1026 = vld [vmem:[%s1025] sm:$0xff]
    %v1027 = vld [vmem:[%s1025 + $0x8] sm:$0xff]
    %v1028 = vld [vmem:[%s1025 + $0x10] sm:$0xff]
    %v1029 = vld [vmem:[%s1025 + $0x18] sm:$0xff]
    %v1030 = vld [vmem:[%s1025 + $0x20] sm:$0xff]
    %v1031 = vld [vmem:[%s1025 + $0x28] sm:$0xff]
    %v1032 = vld [vmem:[%s1025 + $0x30] sm:$0xff]
    %v1033 = vld [vmem:[%s1025 + $0x38] sm:$0xff]
    %v1034 = vld [vmem:[%s1025 + $0x40] sm:$0xff]
    %v1035 = vld [vmem:[%s1025 + $0x48] sm:$0xff]
    %v1036 = vld [vmem:[%s1025 + $0x50] sm:$0xff]
    %v1037 = vld [vmem:[%s1025 + $0x58] sm:$0xff]
    %v1038 = vld [vmem:[%s1025 + $0x60] sm:$0xff]
    %v1039 = vld [vmem:[%s1025 + $0x68] sm:$0xff]
    %v1040 = vld [vmem:[%s1025 + $0x70] sm:$0xff]
    %v1041 = vld [vmem:[%s1025 + $0x78] sm:$0xff]
    %s1042 = scalar_lea.vmem [#allocation8], 512
    %v1043 = vld [vmem:[%s1042] sm:$0xff]
    %v1044 = vld [vmem:[%s1042 + $0x8] sm:$0xff]
    %v1045 = vld [vmem:[%s1042 + $0x10] sm:$0xff]
    %v1046 = vld [vmem:[%s1042 + $0x18] sm:$0xff]
    %v1047 = vld [vmem:[%s1042 + $0x20] sm:$0xff]
    %v1048 = vld [vmem:[%s1042 + $0x28] sm:$0xff]
    %v1049 = vld [vmem:[%s1042 + $0x30] sm:$0xff]
    %v1050 = vld [vmem:[%s1042 + $0x38] sm:$0xff]
    %v1051 = vld [vmem:[%s1042 + $0x40] sm:$0xff]
    %v1052 = vld [vmem:[%s1042 + $0x48] sm:$0xff]
    %v1053 = vld [vmem:[%s1042 + $0x50] sm:$0xff]
    %v1054 = vld [vmem:[%s1042 + $0x58] sm:$0xff]
    %v1055 = vld [vmem:[%s1042 + $0x60] sm:$0xff]
    %v1056 = vld [vmem:[%s1042 + $0x68] sm:$0xff]
    %v1057 = vld [vmem:[%s1042 + $0x70] sm:$0xff]
    %v1058 = vld [vmem:[%s1042 + $0x78] sm:$0xff]
    %s1059 = scalar_lea.vmem [#allocation8], 640
    %v1060 = vld [vmem:[%s1059] sm:$0xff]
    %v1061 = vld [vmem:[%s1059 + $0x8] sm:$0xff]
    %v1062 = vld [vmem:[%s1059 + $0x10] sm:$0xff]
    %v1063 = vld [vmem:[%s1059 + $0x18] sm:$0xff]
    %v1064 = vld [vmem:[%s1059 + $0x20] sm:$0xff]
    %v1065 = vld [vmem:[%s1059 + $0x28] sm:$0xff]
    %v1066 = vld [vmem:[%s1059 + $0x30] sm:$0xff]
    %v1067 = vld [vmem:[%s1059 + $0x38] sm:$0xff]
    %v1068 = vld [vmem:[%s1059 + $0x40] sm:$0xff]
    %v1069 = vld [vmem:[%s1059 + $0x48] sm:$0xff]
    %v1070 = vld [vmem:[%s1059 + $0x50] sm:$0xff]
    %v1071 = vld [vmem:[%s1059 + $0x58] sm:$0xff]
    %v1072 = vld [vmem:[%s1059 + $0x60] sm:$0xff]
    %v1073 = vld [vmem:[%s1059 + $0x68] sm:$0xff]
    %v1074 = vld [vmem:[%s1059 + $0x70] sm:$0xff]
    %v1075 = vld [vmem:[%s1059 + $0x78] sm:$0xff]
    %s1076 = scalar_lea.vmem [#allocation7], 1
    %v1077 = vld [vmem:[%s1076] sm:$0x1]
    %s1078 = scalar_lea.vmem %s3, 1
    %v1079 = vld [vmem:[%s1078] sm:$0x1]
    %v1084 = vrot.slane %v970, 7
    %v1085 = vrot.slane %v971, 7
    %v1086 = vsel %vm542, %v1084, %v1085
    %v1087 = vrot.slane %v972, 7
    %v1088 = vsel %vm542, %v1085, %v1087
    %v1089 = vrot.slane %v973, 7
    %v1090 = vsel %vm542, %v1087, %v1089
    %v1095 = vsel %vm542, 0.0, %v1084
    %v1096 = vsel %vm158, 0.0, %v1095
    %v1097 = vsel %vm159, 0.0, %v1086
    %v1098 = vsel %vm160, 0.0, %v1088
    %v1099 = vsel %vm161, 0.0, %v1090
    %v1100 = vrot.slane %v970, 1
    %v1101 = vrot.slane %v971, 1
    %v1102 = vsel %vm559, %v1100, %v1101
    %v1103 = vrot.slane %v972, 1
    %v1104 = vsel %vm559, %v1101, %v1103
    %v1105 = vrot.slane %v973, 1
    %v1106 = vsel %vm559, %v1103, %v1105
    %v1111 = vsel %vm559, %v1105, 0.0
    %v1112 = vsel %vm162, 0.0, %v1102
    %v1113 = vsel %vm163, 0.0, %v1104
    %v1114 = vsel %vm164, 0.0, %v1106
    %v1115 = vsel %vm165, 0.0, %v1111
    %1116 = vmatpush.msra.mxu0 %v1007
    %1117 = vmatpush.msra.mxu0 %v1006
    %1118 = vmatpush.msra.mxu0 %v1005
    %1119 = vmatpush.msra.mxu0 %v1004
    %1120 = vmatpush.msra.mxu0 %v1003
    %1121 = vmatpush.msra.mxu0 %v1002
    %1122 = vmatpush.msra.mxu0 %v1001
    %1123 = vmatpush.msra.mxu0 %v1000
    %1124 = vmatpush.msra.mxu0 %v999
    %1125 = vmatpush.msra.mxu0 %v998
    %1126 = vmatpush.msra.mxu0 %v997
    %1127 = vmatpush.msra.mxu0 %v996
    %1128 = vmatpush.msra.mxu0 %v995
    %1129 = vmatpush.msra.mxu0 %v994
    %1130 = vmatpush.msra.mxu0 %v993
    %1131 = vmatpush.msra.mxu0 %v992
    %1132 = vmatmul.f32.gmra.mxu0 %v970
    %v1133 = vpop.f32.mrf.mxu0
    %v1134 = vadd.f32 0.0, %v1133
    %1135 = vmatmul.f32.gmra.mxu0 %v971
    %v1136 = vpop.f32.mrf.mxu0
    %v1137 = vadd.f32 0.0, %v1136
    %1138 = vmatmul.f32.gmra.mxu0 %v972
    %v1139 = vpop.f32.mrf.mxu0
    %v1140 = vadd.f32 0.0, %v1139
    %1141 = vmatmul.f32.gmra.mxu0 %v973
    %v1142 = vpop.f32.mrf.mxu0
    %v1143 = vadd.f32 0.0, %v1142
    %1144 = vdwg.mxu0
    %1145 = vmatpush.msra.mxu0 %v990
    %1146 = vmatpush.msra.mxu0 %v989
    %1147 = vmatpush.msra.mxu0 %v988
    %1148 = vmatpush.msra.mxu0 %v987
    %1149 = vmatpush.msra.mxu0 %v986
    %1150 = vmatpush.msra.mxu0 %v985
    %1151 = vmatpush.msra.mxu0 %v984
    %1152 = vmatpush.msra.mxu0 %v983
    %1153 = vmatpush.msra.mxu0 %v982
    %1154 = vmatpush.msra.mxu0 %v981
    %1155 = vmatpush.msra.mxu0 %v980
    %1156 = vmatpush.msra.mxu0 %v979
    %1157 = vmatpush.msra.mxu0 %v978
    %1158 = vmatpush.msra.mxu0 %v977
    %1159 = vmatpush.msra.mxu0 %v976
    %1160 = vmatpush.msra.mxu0 %v975
    %1161 = vmatmul.f32.gmra.mxu0 %v1096
    %v1162 = vpop.f32.mrf.mxu0
    %v1163 = vadd.f32 %v1134, %v1162
    %1164 = vmatmul.f32.gmra.mxu0 %v1097
    %v1165 = vpop.f32.mrf.mxu0
    %v1166 = vadd.f32 %v1137, %v1165
    %1167 = vmatmul.f32.gmra.mxu0 %v1098
    %v1168 = vpop.f32.mrf.mxu0
    %v1169 = vadd.f32 %v1140, %v1168
    %1170 = vmatmul.f32.gmra.mxu0 %v1099
    %v1171 = vpop.f32.mrf.mxu0
    %v1172 = vadd.f32 %v1143, %v1171
    %1173 = vdwg.mxu0
    %1174 = vmatpush.msra.mxu0 %v1024
    %1175 = vmatpush.msra.mxu0 %v1023
    %1176 = vmatpush.msra.mxu0 %v1022
    %1177 = vmatpush.msra.mxu0 %v1021
    %1178 = vmatpush.msra.mxu0 %v1020
    %1179 = vmatpush.msra.mxu0 %v1019
    %1180 = vmatpush.msra.mxu0 %v1018
    %1181 = vmatpush.msra.mxu0 %v1017
    %1182 = vmatpush.msra.mxu0 %v1016
    %1183 = vmatpush.msra.mxu0 %v1015
    %1184 = vmatpush.msra.mxu0 %v1014
    %1185 = vmatpush.msra.mxu0 %v1013
    %1186 = vmatpush.msra.mxu0 %v1012
    %1187 = vmatpush.msra.mxu0 %v1011
    %1188 = vmatpush.msra.mxu0 %v1010
    %1189 = vmatpush.msra.mxu0 %v1009
    %1190 = vmatmul.f32.gmra.mxu0 %v1112
    %v1191 = vpop.f32.mrf.mxu0
    %v1192 = vadd.f32 0.0, %v1191
    %1193 = vmatmul.f32.gmra.mxu0 %v1113
    %v1194 = vpop.f32.mrf.mxu0
    %v1195 = vadd.f32 0.0, %v1194
    %1196 = vmatmul.f32.gmra.mxu0 %v1114
    %v1197 = vpop.f32.mrf.mxu0
    %v1198 = vadd.f32 0.0, %v1197
    %1199 = vmatmul.f32.gmra.mxu0 %v1115
    %v1200 = vpop.f32.mrf.mxu0
    %v1201 = vadd.f32 0.0, %v1200
    %1202 = vdwg.mxu0
    %v1203 = vadd.f32 %v1163, %v1192
    %v1204 = vadd.f32 %v1166, %v1195
    %v1205 = vadd.f32 %v1169, %v1198
    %v1206 = vadd.f32 %v1172, %v1201
    %v1207 = vadd.f32 %v1203, %v1204
    %v1208 = vadd.f32 %v1207, %v1205
    %v1209 = vadd.f32 %v1208, %v1206
    %v1210 = vrot.slane %v1209, 4
    %v1211 = vadd.f32 %v1209, %v1210
    %v1212 = vrot.slane %v1211, 2
    %v1213 = vadd.f32 %v1211, %v1212
    %v1214 = vrot.slane %v1213, 1
    %v1215 = vadd.f32 %v1213, %v1214
    %v1216 = vmul.f32 %v1203, %v1203
    %v1217 = vmul.f32 %v1204, %v1204
    %v1218 = vmul.f32 %v1205, %v1205
    %v1219 = vmul.f32 %v1206, %v1206
    %v1220 = vadd.f32 %v1216, %v1217
    %v1221 = vadd.f32 %v1220, %v1218
    %v1222 = vadd.f32 %v1221, %v1219
    %v1223 = vrot.slane %v1222, 4
    %v1224 = vadd.f32 %v1222, %v1223
    %v1225 = vrot.slane %v1224, 2
    %v1226 = vadd.f32 %v1224, %v1225
    %v1227 = vrot.slane %v1226, 1
    %v1228 = vadd.f32 %v1226, %v1227
    %v1229 = vsel %vm542, %v1215, %v1228
    %1230 = vmatpush.msra.mxu0 %v431
    %1231 = vmatpush.msra.mxu0 %v430
    %1232 = vmatpush.msra.mxu0 %v429
    %1233 = vmatpush.msra.mxu0 %v428
    %1234 = vmatpush.msra.mxu0 %v427
    %1235 = vmatpush.msra.mxu0 %v426
    %1236 = vmatpush.msra.mxu0 %v425
    %1237 = vmatpush.msra.mxu0 %v424
    %1238 = vmatpush.msra.mxu0 %v423
    %1239 = vmatpush.msra.mxu0 %v422
    %1240 = vmatpush.msra.mxu0 %v421
    %1241 = vmatpush.msra.mxu0 %v420
    %1242 = vmatpush.msra.mxu0 %v419
    %1243 = vmatpush.msra.mxu0 %v418
    %1244 = vmatpush.msra.mxu0 %v417
    %1245 = vmatpush.msra.mxu0 %v416
    %1246 = vmatmul.f32.gmra.mxu0 %v1229
    %v1247 = vpop.f32.mrf.mxu0
    %v1248 = vadd.f32 0.0, %v1247
    %1249 = vdwg.mxu0
    %v1250 = vmul.f32 %v1248, 0.001953125
    %v1251 = vmul.f32 %v1250, %v1250
    %v1253 = vrot.slane %v1251, 7
    %v1255 = vsub.f32 %v1250, %v1253
    %v1256 = vmax.f32 %v1255, 0.0
    %v1257 = vadd.f32 %v1256, 1e-05
    %v1258 = vrsqrt.pop %v1257
    %v1259 = vmul.f32 %v1258, %v1257
    %v1260 = vmul.f32 %v1259, %v1258
    %v1261 = vmul.f32 0.5, %v1260
    %v1262 = vsub.f32 1.5, %v1261
    %v1263 = vmul.f32 %v1258, %v1262
    %vm1264 = vweird.f32 %v1257
    %vm1265 = vweird.f32 %v1258
    %vm1266 = vmor %vm1264, %vm1265
    %v1267 = vsel %vm1266, %v1258, %v1263
    %1269 = vst [vmem:[#allocation1] sm:$0xff] %v1267
    %s1270 = scalar_lea.vmem [#allocation1], 1
    %v1271 = vld [vmem:[%s1270] ss:$9 sm:$0xff]
    %v1273 = vmul.f32 %v1077, %v1271
    %v1274 = vmul.f32 %v1250, %v1273
    %v1275 = vsub.f32 %v1079, %v1274
    %v1277 = vperm.slane %v1273, 0
    %v1279 = vmul.f32 %v1203, %v1277
    %v1280 = vmul.f32 %v1204, %v1277
    %v1281 = vmul.f32 %v1205, %v1277
    %v1282 = vmul.f32 %v1206, %v1277
    %v1284 = vperm.slane %v1275, 0
    %v1286 = vadd.f32 %v1279, %v1284
    %v1287 = vadd.f32 %v1280, %v1284
    %v1288 = vadd.f32 %v1281, %v1284
    %v1289 = vadd.f32 %v1282, %v1284
    %v1290 = vmax.f32 %v1286, 0.0
    %v1291 = vmax.f32 %v1287, 0.0
    %v1292 = vmax.f32 %v1288, 0.0
    %v1293 = vmax.f32 %v1289, 0.0
    %s1294 = scalar_lea.vmem %s5, 1
    %v1295 = vld [vmem:[%s1294] sm:$0x1]
    %s1296 = scalar_lea.vmem [#allocation10], 1
    %v1297 = vld [vmem:[%s1296] sm:$0x1]
    %v1302 = vrot.slane %v1290, 7
    %v1303 = vrot.slane %v1291, 7
    %v1304 = vsel %vm542, %v1302, %v1303
    %v1305 = vrot.slane %v1292, 7
    %v1306 = vsel %vm542, %v1303, %v1305
    %v1307 = vrot.slane %v1293, 7
    %v1308 = vsel %vm542, %v1305, %v1307
    %v1313 = vsel %vm542, 0.0, %v1302
    %v1314 = vsel %vm158, 0.0, %v1313
    %v1315 = vsel %vm159, 0.0, %v1304
    %v1316 = vsel %vm160, 0.0, %v1306
    %v1317 = vsel %vm161, 0.0, %v1308
    %v1318 = vrot.slane %v1290, 1
    %v1319 = vrot.slane %v1291, 1
    %v1320 = vsel %vm559, %v1318, %v1319
    %v1321 = vrot.slane %v1292, 1
    %v1322 = vsel %vm559, %v1319, %v1321
    %v1323 = vrot.slane %v1293, 1
    %v1324 = vsel %vm559, %v1321, %v1323
    %v1329 = vsel %vm559, %v1323, 0.0
    %v1330 = vsel %vm162, 0.0, %v1320
    %v1331 = vsel %vm163, 0.0, %v1322
    %v1332 = vsel %vm164, 0.0, %v1324
    %v1333 = vsel %vm165, 0.0, %v1329
    %1334 = vmatpush.msra.mxu0 %v1058
    %1335 = vmatpush.msra.mxu0 %v1057
    %1336 = vmatpush.msra.mxu0 %v1056
    %1337 = vmatpush.msra.mxu0 %v1055
    %1338 = vmatpush.msra.mxu0 %v1054
    %1339 = vmatpush.msra.mxu0 %v1053
    %1340 = vmatpush.msra.mxu0 %v1052
    %1341 = vmatpush.msra.mxu0 %v1051
    %1342 = vmatpush.msra.mxu0 %v1050
    %1343 = vmatpush.msra.mxu0 %v1049
    %1344 = vmatpush.msra.mxu0 %v1048
    %1345 = vmatpush.msra.mxu0 %v1047
    %1346 = vmatpush.msra.mxu0 %v1046
    %1347 = vmatpush.msra.mxu0 %v1045
    %1348 = vmatpush.msra.mxu0 %v1044
    %1349 = vmatpush.msra.mxu0 %v1043
    %1350 = vmatmul.f32.gmra.mxu0 %v1290
    %v1351 = vpop.f32.mrf.mxu0
    %v1352 = vadd.f32 0.0, %v1351
    %1353 = vmatmul.f32.gmra.mxu0 %v1291
    %v1354 = vpop.f32.mrf.mxu0
    %v1355 = vadd.f32 0.0, %v1354
    %1356 = vmatmul.f32.gmra.mxu0 %v1292
    %v1357 = vpop.f32.mrf.mxu0
    %v1358 = vadd.f32 0.0, %v1357
    %1359 = vmatmul.f32.gmra.mxu0 %v1293
    %v1360 = vpop.f32.mrf.mxu0
    %v1361 = vadd.f32 0.0, %v1360
    %1362 = vdwg.mxu0
    %1363 = vmatpush.msra.mxu0 %v1041
    %1364 = vmatpush.msra.mxu0 %v1040
    %1365 = vmatpush.msra.mxu0 %v1039
    %1366 = vmatpush.msra.mxu0 %v1038
    %1367 = vmatpush.msra.mxu0 %v1037
    %1368 = vmatpush.msra.mxu0 %v1036
    %1369 = vmatpush.msra.mxu0 %v1035
    %1370 = vmatpush.msra.mxu0 %v1034
    %1371 = vmatpush.msra.mxu0 %v1033
    %1372 = vmatpush.msra.mxu0 %v1032
    %1373 = vmatpush.msra.mxu0 %v1031
    %1374 = vmatpush.msra.mxu0 %v1030
    %1375 = vmatpush.msra.mxu0 %v1029
    %1376 = vmatpush.msra.mxu0 %v1028
    %1377 = vmatpush.msra.mxu0 %v1027
    %1378 = vmatpush.msra.mxu0 %v1026
    %1379 = vmatmul.f32.gmra.mxu0 %v1314
    %v1380 = vpop.f32.mrf.mxu0
    %v1381 = vadd.f32 %v1352, %v1380
    %1382 = vmatmul.f32.gmra.mxu0 %v1315
    %v1383 = vpop.f32.mrf.mxu0
    %v1384 = vadd.f32 %v1355, %v1383
    %1385 = vmatmul.f32.gmra.mxu0 %v1316
    %v1386 = vpop.f32.mrf.mxu0
    %v1387 = vadd.f32 %v1358, %v1386
    %1388 = vmatmul.f32.gmra.mxu0 %v1317
    %v1389 = vpop.f32.mrf.mxu0
    %v1390 = vadd.f32 %v1361, %v1389
    %1391 = vdwg.mxu0
    %1392 = vmatpush.msra.mxu0 %v1075
    %1393 = vmatpush.msra.mxu0 %v1074
    %1394 = vmatpush.msra.mxu0 %v1073
    %1395 = vmatpush.msra.mxu0 %v1072
    %1396 = vmatpush.msra.mxu0 %v1071
    %1397 = vmatpush.msra.mxu0 %v1070
    %1398 = vmatpush.msra.mxu0 %v1069
    %1399 = vmatpush.msra.mxu0 %v1068
    %1400 = vmatpush.msra.mxu0 %v1067
    %1401 = vmatpush.msra.mxu0 %v1066
    %1402 = vmatpush.msra.mxu0 %v1065
    %1403 = vmatpush.msra.mxu0 %v1064
    %1404 = vmatpush.msra.mxu0 %v1063
    %1405 = vmatpush.msra.mxu0 %v1062
    %1406 = vmatpush.msra.mxu0 %v1061
    %1407 = vmatpush.msra.mxu0 %v1060
    %1408 = vmatmul.f32.gmra.mxu0 %v1330
    %v1409 = vpop.f32.mrf.mxu0
    %v1410 = vadd.f32 0.0, %v1409
    %1411 = vmatmul.f32.gmra.mxu0 %v1331
    %v1412 = vpop.f32.mrf.mxu0
    %v1413 = vadd.f32 0.0, %v1412
    %1414 = vmatmul.f32.gmra.mxu0 %v1332
    %v1415 = vpop.f32.mrf.mxu0
    %v1416 = vadd.f32 0.0, %v1415
    %1417 = vmatmul.f32.gmra.mxu0 %v1333
    %v1418 = vpop.f32.mrf.mxu0
    %v1419 = vadd.f32 0.0, %v1418
    %1420 = vdwg.mxu0
    %v1421 = vadd.f32 %v1381, %v1410
    %v1422 = vadd.f32 %v1384, %v1413
    %v1423 = vadd.f32 %v1387, %v1416
    %v1424 = vadd.f32 %v1390, %v1419
    %v1425 = vadd.f32 %v1421, %v1422
    %v1426 = vadd.f32 %v1425, %v1423
    %v1427 = vadd.f32 %v1426, %v1424
    %v1428 = vrot.slane %v1427, 4
    %v1429 = vadd.f32 %v1427, %v1428
    %v1430 = vrot.slane %v1429, 2
    %v1431 = vadd.f32 %v1429, %v1430
    %v1432 = vrot.slane %v1431, 1
    %v1433 = vadd.f32 %v1431, %v1432
    %v1434 = vmul.f32 %v1421, %v1421
    %v1435 = vmul.f32 %v1422, %v1422
    %v1436 = vmul.f32 %v1423, %v1423
    %v1437 = vmul.f32 %v1424, %v1424
    %v1438 = vadd.f32 %v1434, %v1435
    %v1439 = vadd.f32 %v1438, %v1436
    %v1440 = vadd.f32 %v1439, %v1437
    %v1441 = vrot.slane %v1440, 4
    %v1442 = vadd.f32 %v1440, %v1441
    %v1443 = vrot.slane %v1442, 2
    %v1444 = vadd.f32 %v1442, %v1443
    %v1445 = vrot.slane %v1444, 1
    %v1446 = vadd.f32 %v1444, %v1445
    %v1447 = vsel %vm542, %v1433, %v1446
    %1448 = vmatpush.msra.mxu0 %v431
    %1449 = vmatpush.msra.mxu0 %v430
    %1450 = vmatpush.msra.mxu0 %v429
    %1451 = vmatpush.msra.mxu0 %v428
    %1452 = vmatpush.msra.mxu0 %v427
    %1453 = vmatpush.msra.mxu0 %v426
    %1454 = vmatpush.msra.mxu0 %v425
    %1455 = vmatpush.msra.mxu0 %v424
    %1456 = vmatpush.msra.mxu0 %v423
    %1457 = vmatpush.msra.mxu0 %v422
    %1458 = vmatpush.msra.mxu0 %v421
    %1459 = vmatpush.msra.mxu0 %v420
    %1460 = vmatpush.msra.mxu0 %v419
    %1461 = vmatpush.msra.mxu0 %v418
    %1462 = vmatpush.msra.mxu0 %v417
    %1463 = vmatpush.msra.mxu0 %v416
    %1464 = vmatmul.f32.gmra.mxu0 %v1447
    %v1465 = vpop.f32.mrf.mxu0
    %v1466 = vadd.f32 0.0, %v1465
    %1467 = vdwg.mxu0
    %v1468 = vmul.f32 %v1466, 0.001953125
    %v1469 = vmul.f32 %v1468, %v1468
    %v1471 = vrot.slane %v1469, 7
    %v1473 = vsub.f32 %v1468, %v1471
    %v1474 = vmax.f32 %v1473, 0.0
    %v1475 = vadd.f32 %v1474, 1e-05
    %v1476 = vrsqrt.pop %v1475
    %v1477 = vmul.f32 %v1476, %v1475
    %v1478 = vmul.f32 %v1477, %v1476
    %v1479 = vmul.f32 0.5, %v1478
    %v1480 = vsub.f32 1.5, %v1479
    %v1481 = vmul.f32 %v1476, %v1480
    %vm1482 = vweird.f32 %v1475
    %vm1483 = vweird.f32 %v1476
    %vm1484 = vmor %vm1482, %vm1483
    %v1485 = vsel %vm1484, %v1476, %v1481
    %1487 = vst [vmem:[#allocation1] sm:$0xff] %v1485
    %s1488 = scalar_lea.vmem [#allocation1], 1
    %v1489 = vld [vmem:[%s1488] ss:$9 sm:$0xff]
    %v1491 = vmul.f32 %v1295, %v1489
    %v1492 = vmul.f32 %v1468, %v1491
    %v1493 = vsub.f32 %v1297, %v1492
    %v1495 = vperm.slane %v1491, 0
    %v1497 = vmul.f32 %v1421, %v1495
    %v1498 = vmul.f32 %v1422, %v1495
    %v1499 = vmul.f32 %v1423, %v1495
    %v1500 = vmul.f32 %v1424, %v1495
    %v1502 = vperm.slane %v1493, 0
    %v1504 = vadd.f32 %v1497, %v1502
    %v1505 = vadd.f32 %v1498, %v1502
    %v1506 = vadd.f32 %v1499, %v1502
    %v1507 = vadd.f32 %v1500, %v1502
    %v1508 = vadd.f32 %v1504, %v970
    %v1509 = vadd.f32 %v1505, %v971
    %v1510 = vadd.f32 %v1506, %v972
    %v1511 = vadd.f32 %v1507, %v973
    %v1512 = vmax.f32 %v1508, 0.0
    %v1513 = vmax.f32 %v1509, 0.0
    %v1514 = vmax.f32 %v1510, 0.0
    %v1515 = vmax.f32 %v1511, 0.0
    %1516 = vst [vmem:[#allocation11] sm:$0xff] %v1512
    %1517 = vst [vmem:[#allocation11 + $0x8] sm:$0xff] %v1513
    %1518 = vst [vmem:[#allocation11 + $0x10] sm:$0xff] %v1514
    %1519 = vst [vmem:[#allocation11 + $0x18] sm:$0xff] %v1515
    // Predicated region
    $region50: #{tpu_custom_call.1} parent=1 // pred_check
      _
    $region51: #{tpu_custom_call.1} parent=1 // pred_check_branch
      %1521 = sbr.rel (0) target = $region53
    $region52: #{tpu_custom_call.1} parent=1 // pred_region
      %1523 = vsyncadd [#allocation4], 0
      %s1524 = sshll.u32 [#allocation11], 4
      %s1525 = int_to_ptr.vmem [resolvable:$true] %s1524
      %s1526 = sshll.u32 %s7, 4
      %s1527 = int_to_ptr.hbm [resolvable:$true] %s1526
      %1532 = dma.vmem_to_hbm [thread:$0]  %s1525, 512, %s1527, [#allocation4], 128, 128, 8
    $region53: #{tpu_custom_call.1} parent=1 // pred_fallthru
      _
    // Predicated region
    $region54: #{tpu_custom_call.1} parent=1 // pred_check
      _
    $region55: #{tpu_custom_call.1} parent=1 // pred_check_branch
      %1534 = sbr.rel (0) target = $region57
    $region56: #{tpu_custom_call.1} parent=1 // pred_region
      %1536 = dma.done [#allocation4], 512
    $region57: #{tpu_custom_call.1} parent=1 // pred_fallthru
      _
    %1537 = vsyncpa [#allocation3], 1
    %1538 = vsyncpa [#allocation6], 1
    %1539 = vsyncpa [#allocation9], 1
    %1540 = vsyncpa [#allocation4], 1

</llo_original>
